<compile_context>
chip_gen: v7x
topology: tpu7x:2x2x1
jax: 0.10.0
libtpu: 0.0.40
codegen_flags: <defaults>
</compile_context>

<pallas_src>
import functools
from dataclasses import dataclass

import jax
import jax.numpy as jnp
from jax import lax
from jax.experimental import pallas as pl
from jax.experimental.pallas import tpu as pltpu


# ----------------------------- Pallas kernels -----------------------------

def _quantize_kernel(z_ref, cb_ref, esq_ref, *out_refs,
                     preprocess: bool, emit_z: bool, v_chunk: int):
    """Fused (optional) preprocess + nearest-codebook token selection.

    z_ref:    (TILE_N, D)   latents tile
    cb_ref:   (V_pad, D)    codebook (VMEM-resident across grid steps)
    esq_ref:  (V_pad, 1)    precomputed 0.5*||e||^2 per codebook row
    out_refs: (z_out?, tok) z_out (TILE_N, D) only when emit_z;
              tok (1, TILE_N) int32, lane-dense, un-replicated.
    """
    if emit_z:
        z_out_ref, tok_ref = out_refs
    else:
        (tok_ref,) = out_refs

    z = z_ref[...].astype(jnp.float32)                      # (TILE_N, D)
    if preprocess:                                           # fused x.mul(2).sub(1)
        z = z * 2.0 - 1.0
    if emit_z:
        z_out_ref[...] = z.astype(z_out_ref.dtype)

    tile_n = z.shape[0]
    v_total = cb_ref.shape[0]
    n_chunks = v_total // v_chunk

    def chunk_dist(cb_c, esq_c):
        # argmin_e ||z - e||^2 == argmin_e (0.5*||e||^2 - z.e)  (||z||^2 dropped,
        # factor 2 folded into the precomputed norms).
        # f32 MXU inputs: kernel is HBM-bound here, so f32 is free and keeps
        # exact token parity with an f32 reference (no bf16 near-tie flips).
        scores = lax.dot_general(cb_c, z, (((1,), (1,)), ((), ())),
                                 preferred_element_type=jnp.float32)  # (vc, TILE_N)
        dist = esq_c - scores                                         # (vc, TILE_N)
        d = jnp.min(dist, axis=0, keepdims=True)                      # (1, TILE_N)
        row = lax.broadcasted_iota(jnp.int32, dist.shape, 0)
        # first-index tie-breaking (matches torch/jnp argmin semantics)
        i = jnp.min(jnp.where(dist <= d, row, jnp.int32(2 ** 30)),
                    axis=0, keepdims=True)
        return d, i

    if n_chunks == 1:
        _, best_i = chunk_dist(cb_ref[...], esq_ref[...])
    else:
        # Running min/argmin over V-chunks: the (TILE_N, V) distance matrix is
        # never materialized, so vocab can scale past v7x's 64 MiB VMEM.
        def body(c, carry):
            best_d, best_i = carry
            off = pl.multiple_of(c * v_chunk, v_chunk)
            d_c, i_c = chunk_dist(cb_ref[pl.ds(off, v_chunk), :],
                                  esq_ref[pl.ds(off, v_chunk), :])
            i_c = i_c + off
            upd = d_c < best_d                # strict '<': earlier chunk wins ties
            return jnp.where(upd, d_c, best_d), jnp.where(upd, i_c, best_i)

        init = (jnp.full((1, tile_n), jnp.inf, jnp.float32),
                jnp.zeros((1, tile_n), jnp.int32))
        _, best_i = lax.fori_loop(0, n_chunks, body, init)

    tok_ref[...] = best_i                                    # (1, TILE_N) vst


def _postprocess_kernel(y_ref, o_ref):
    # y.add(1).div(2)  — f32 elementwise (v5e VPU/EUP have no bf16)
    o_ref[...] = (y_ref[...] + 1.0) * 0.5


# ----------------------------- pallas_call wrappers -----------------------------

def _pick_tile_n(n, requested):
    """Big tiles (default 1024) but keep >=2 grid steps when N is small."""
    t = requested
    while t > 256 and n < 2 * t:
        t //= 2
    return max(t, 8)


def quantize_tokens(x_flat, codebook, e_sq_half, *, preprocess: bool,
                    return_z: bool, tile_n: int = 1024, v_chunk_max: int = 1024):
    """Nearest-codebook quantization.

    Returns (z_preprocessed (N,D), tokens (N,) int32) when return_z, else just
    tokens.  e_sq_half is the precomputed (V,1) column of 0.5*||e||^2.
    """
    n, d = x_flat.shape
    v = codebook.shape[0]

    tile_n = _pick_tile_n(n, tile_n)
    n_pad = -(-n // tile_n) * tile_n
    v_pad = -(-v // 128) * 128
    if v_pad > v_chunk_max:
        v_chunk = v_chunk_max
        v_pad = -(-v_pad // v_chunk) * v_chunk
    else:
        v_chunk = v_pad

    if n_pad != n:
        # TODO(synk): mask the ragged tail in-kernel instead of this extra HBM
        # pass; not hit when N is a tile multiple (the common case).
        x_flat = jnp.pad(x_flat, ((0, n_pad - n), (0, 0)))
    if v_pad != v:
        codebook = jnp.pad(codebook, ((0, v_pad - v), (0, 0)))
        # Padded rows get a huge norm so they can never win the argmin.
        e_sq_half = jnp.pad(e_sq_half, ((0, v_pad - v), (0, 0)),
                            constant_values=jnp.float32(1e30))

    grid = (n_pad // tile_n,)
    kernel = functools.partial(_quantize_kernel, preprocess=preprocess,
                               emit_z=return_z, v_chunk=v_chunk)

    # TODO(synk): for very large V, add pipeline_mode=pl.Buffered(1) on the two
    # constant-index specs below (grid-invariant inputs don't need 2 buffers)
    # and set vmem_limit_bytes explicitly for v7x's 64 MiB VMEM.
    in_specs = [
        pl.BlockSpec((tile_n, d), lambda i: (i, 0)),   # latents tile (pipelined)
        pl.BlockSpec((v_pad, d), lambda i: (0, 0)),    # codebook, VMEM-resident
        pl.BlockSpec((v_pad, 1), lambda i: (0, 0)),    # 0.5*||e||^2, resident
    ]
    tok_shape = jax.ShapeDtypeStruct((1, n_pad), jnp.int32)
    tok_spec = pl.BlockSpec((1, tile_n), lambda i: (0, i))

    bytes_accessed = (n_pad * d * 4            # z in
                      + v_pad * d * 4          # codebook
                      + v_pad * 4              # norms
                      + n_pad * 4              # tokens out
                      + (n_pad * d * 4 if return_z else 0))
    cost = pl.CostEstimate(flops=2 * n_pad * v_pad * d, transcendentals=0,
                           bytes_accessed=bytes_accessed)

    if return_z:
        out_shape = (jax.ShapeDtypeStruct((n_pad, d), x_flat.dtype), tok_shape)
        out_specs = (pl.BlockSpec((tile_n, d), lambda i: (i, 0)), tok_spec)
    else:
        out_shape = tok_shape
        out_specs = tok_spec

    out = pl.pallas_call(
        kernel,
        out_shape=out_shape,
        grid=grid,
        in_specs=in_specs,
        out_specs=out_specs,
        compiler_params=pltpu.CompilerParams(
            dimension_semantics=("parallel",)),        # 2 TCs on v7x
        cost_estimate=cost,
    )(x_flat, codebook, e_sq_half)

    if return_z:
        z_out, tok = out
        return z_out[:n], tok[0, :n]
    return out[0, :n]


def postprocess_output_2d(y2d, tile_rows: int = 512):
    """Elementwise (y+1)/2 on any 2D view (no transpose needed)."""
    n, d = y2d.shape
    t = min(tile_rows, n)
    if n % t != 0:
        n_pad = -(-n // t) * t
        y2d = jnp.pad(y2d, ((0, n_pad - n), (0, 0)))
    else:
        n_pad = n
    out = pl.pallas_call(
        _postprocess_kernel,
        out_shape=jax.ShapeDtypeStruct((n_pad, d), y2d.dtype),
        grid=(n_pad // t,),
        in_specs=[pl.BlockSpec((t, d), lambda i: (i, 0))],
        out_specs=pl.BlockSpec((t, d), lambda i: (i, 0)),
        compiler_params=pltpu.CompilerParams(dimension_semantics=("parallel",)),
    )(y2d)
    return out[:n] if n_pad != n else out


# ----------------------------- layout helpers -----------------------------

def _nchw_to_flat(x):
    b, c, h, w = x.shape
    return jnp.transpose(x, (0, 2, 3, 1)).reshape(b * h * w, c), (b, c, h, w)


def _flat_to_nchw(x2d, dims):
    b, c, h, w = dims
    return jnp.transpose(x2d.reshape(b, h, w, c), (0, 3, 1, 2))


# ----------------------------- BaseTokenizer (JAX) -----------------------------

@dataclass
class TokenizerEncoderOutput:
    z: jax.Array
    z_quantized: jax.Array
    tokens: jax.Array


class BaseTokenizerPallas:
    def __init__(self, vocab_size: int, embed_dim: int, key):
        self.vocab_size = vocab_size
        self.embed_dim = embed_dim
        # nn.Embedding weight init: uniform(-1/vocab_size, 1/vocab_size)
        self.embedding = jax.random.uniform(
            key, (vocab_size, embed_dim), jnp.float32,
            minval=-1.0 / vocab_size, maxval=1.0 / vocab_size)
        # 0.5*||e||^2 hoisted (factor 2 folded in); (V,1) column so it broadcasts
        # against the (V, TILE_N) distance tile with no transpose in-kernel.
        self._e_sq_half = 0.5 * jnp.sum(
            self.embedding.astype(jnp.float32) ** 2, axis=-1)[:, None]

    def encode(self, x, should_preprocess: bool = False) -> TokenizerEncoderOutput:
        # TODO(synk): encode() is NotImplementedError in BaseTokenizer; identity
        # encoder used here (preprocess fused into the quantize kernel), then VQ
        # against the class's embedding codebook.
        x_flat, dims = _nchw_to_flat(x)
        if should_preprocess:
            z_flat, tokens_flat = quantize_tokens(
                x_flat, self.embedding, self._e_sq_half,
                preprocess=True, return_z=True)
            z = _flat_to_nchw(z_flat, dims)
        else:
            # tokens-only kernel: no redundant z copy streamed back to HBM.
            tokens_flat = quantize_tokens(
                x_flat, self.embedding, self._e_sq_half,
                preprocess=False, return_z=False)
            z = x
        # Codebook-row gather in the wrapper from the returned tokens.
        zq_flat = jnp.take(self.embedding, tokens_flat, axis=0).astype(x.dtype)
        b, c, h, w = dims
        z_q = _flat_to_nchw(zq_flat, dims)
        tokens = tokens_flat.reshape(b, h, w)
        return TokenizerEncoderOutput(z, z_q, tokens)

    def decode(self, z_q, should_postprocess: bool = False):
        # TODO(synk): decode() is NotImplementedError in BaseTokenizer; identity
        # decoder used here, optionally followed by the concrete postprocess.
        if not should_postprocess:
            return z_q
        b, c, h, w = z_q.shape
        # Elementwise op -> transpose-free (B*C, H*W) view (lane-dense last dim).
        y2d = z_q.reshape(b * c, h * w)
        return postprocess_output_2d(y2d).reshape(b, c, h, w)

    def encode_decode(self, x, should_preprocess: bool = False,
                      should_postprocess: bool = False):
        z_q = self.encode(x, should_preprocess).z_quantized
        return self.decode(z_q, should_postprocess)

    def forward(self, x, should_preprocess: bool = False,
                should_postprocess: bool = False):
        out = self.encode(x, should_preprocess)
        # straight-through estimator: forward value == z_q, gradient flows to z
        decoder_input = out.z + lax.stop_gradient(out.z_quantized - out.z)
        reconstructions = self.decode(decoder_input, should_postprocess)
        return out.z, out.z_quantized, reconstructions


# ----------------------------- main -----------------------------

if __name__ == "__main__":
    key = jax.random.PRNGKey(0)
    k_emb, k_x = jax.random.split(key)

    vocab_size = 512
    embed_dim = 128              # lane-dense last dim in the flat layout
    B, H, W = 2, 16, 16          # N = B*H*W = 512 latent vectors

    tokenizer = BaseTokenizerPallas(vocab_size, embed_dim, k_emb)

    # NCHW input with C == embed_dim, values in [0, 1] (image-like)
    x = jax.random.uniform(k_x, (B, embed_dim, H, W), jnp.float32)

    z, z_q, recon = tokenizer.forward(x, should_preprocess=True,
                                      should_postprocess=True)
    jax.block_until_ready((z, z_q, recon))

    assert z.shape == (B, embed_dim, H, W)
    assert z_q.shape == (B, embed_dim, H, W)
    assert recon.shape == (B, embed_dim, H, W)

    # fused preprocess check: z == 2x - 1
    assert bool(jnp.allclose(z, x * 2.0 - 1.0, atol=1e-6))

    # token sanity: shapes/dtype, and selected codes are optimal in f32
    enc = tokenizer.encode(x, should_preprocess=True)
    tokens = enc.tokens
    assert tokens.shape == (B, H, W) and tokens.dtype == jnp.int32
    zf, _ = _nchw_to_flat(z)
    cb = tokenizer.embedding
    # same reduced (cancellation-free) objective the kernel minimizes
    d_ref = 0.5 * jnp.sum(cb * cb, -1)[None, :] - zf @ cb.T
    d_min = d_ref.min(-1)
    d_sel = jnp.take_along_axis(d_ref, tokens.reshape(-1)[:, None], axis=1)[:, 0]
    assert bool(jnp.all(d_sel <= d_min + 1e-7))

    # postprocess kernel check: recon == (z_q + 1) / 2
    assert bool(jnp.allclose(recon, (z_q + 1.0) * 0.5, atol=1e-6))

    # no-preprocess path: tokens-only kernel output, z is the identity (no copy)
    enc0 = tokenizer.encode(x, should_preprocess=False)
    assert bool(jnp.allclose(enc0.z, x))
    assert enc0.tokens.shape == (B, H, W)

    # V-chunked running-argmin path (used for large vocabularies) agrees exactly
    # with the single-chunk path.
    xf, _ = _nchw_to_flat(x)
    tok_a = quantize_tokens(xf, tokenizer.embedding, tokenizer._e_sq_half,
                            preprocess=True, return_z=False)
    tok_b = quantize_tokens(xf, tokenizer.embedding, tokenizer._e_sq_half,
                            preprocess=True, return_z=False, v_chunk_max=128)
    assert bool(jnp.all(tok_a == tok_b))

    jax.block_until_ready((enc0.tokens, tok_a, tok_b))
    print("KERNEL_OK")
</pallas_src>

<mosaic_0001>
module attributes {stable_mosaic.version = 11 : i64} {
  func.func @_quantize_kernel(%arg0: i32, %arg1: memref<256x128xf32, #tpu.memory_space<vmem>>, %arg2: memref<512x128xf32, #tpu.memory_space<vmem>>, %arg3: memref<512x1xf32, #tpu.memory_space<vmem>>, %arg4: memref<256x128xf32, #tpu.memory_space<vmem>>, %arg5: memref<1x256xi32, #tpu.memory_space<vmem>>) attributes {dimension_semantics = [#tpu.dimension_semantics<parallel>], iteration_bounds = array<i64: 2>, scalar_prefetch = 0 : i64, scratch_operands = 0 : i64, tpu.core_type = #tpu.core_type<tc>, window_params = [{transform_indices = @transform_0, window_bounds = array<i64: 256, 128>}, {pipeline_mode = #tpu.pipeline_mode<synchronous>, transform_indices = @transform_1, window_bounds = array<i64: 512, 128>}, {pipeline_mode = #tpu.pipeline_mode<synchronous>, transform_indices = @transform_2, window_bounds = array<i64: 512, 1>}, {transform_indices = @transform_3, window_bounds = array<i64: 256, 128>}, {transform_indices = @transform_4, window_bounds = array<i64: 1, 256>}]} {
    %c0 = arith.constant 0 : index
    %c0_0 = arith.constant 0 : index
    %0 = vector.load %arg1[%c0, %c0_0] : memref<256x128xf32, #tpu.memory_space<vmem>>, vector<256x128xf32>
    %cst = arith.constant 2.000000e+00 : f32
    %1 = vector.broadcast %cst : f32 to vector<256x128xf32>
    %2 = arith.mulf %0, %1 : vector<256x128xf32>
    %cst_1 = arith.constant 1.000000e+00 : f32
    %3 = vector.broadcast %cst_1 : f32 to vector<256x128xf32>
    %4 = arith.subf %2, %3 : vector<256x128xf32>
    %c0_2 = arith.constant 0 : index
    %c0_3 = arith.constant 0 : index
    %5 = vector.load %arg4[%c0_2, %c0_3] : memref<256x128xf32, #tpu.memory_space<vmem>>, vector<256x128xf32>
    tpu.vector_store %arg4[%c0_2, %c0_3], %4 {strides = array<i32>} : memref<256x128xf32, #tpu.memory_space<vmem>>, vector<256x128xf32>,
    %c0_4 = arith.constant 0 : index
    %c0_5 = arith.constant 0 : index
    %6 = vector.load %arg2[%c0_4, %c0_5] : memref<512x128xf32, #tpu.memory_space<vmem>>, vector<512x128xf32>
    %c0_6 = arith.constant 0 : index
    %c0_7 = arith.constant 0 : index
    %7 = vector.load %arg3[%c0_6, %c0_7] : memref<512x1xf32, #tpu.memory_space<vmem>>, vector<512x1xf32>
    %cst_8 = arith.constant dense<0.000000e+00> : vector<512x256xf32>
    %8 = tpu.matmul %6, %4, %cst_8 {dimension_numbers = #tpu.dot_dimension_numbers<[1], [1], [0], [0], [0, 0, 1, 0], [], []>} : vector<512x128xf32>, vector<256x128xf32>, vector<512x256xf32> -> vector<512x256xf32>
    %9 = vector.broadcast %7 : vector<512x1xf32> to vector<512x256xf32>
    %10 = arith.subf %9, %8 : vector<512x256xf32>
    %cst_9 = arith.constant dense<0x7F800000> : vector<256xf32>
    %11 = vector.multi_reduction <minimumf>, %10, %cst_9 [0] : vector<512x256xf32> to vector<256xf32>
    %12 = vector.shape_cast %11 : vector<256xf32> to vector<1x256xf32>
    %13 = tpu.iota {dimensions = array<i32: 0>} : vector<512x256xi32>
    %14 = vector.broadcast %12 : vector<1x256xf32> to vector<512x256xf32>
    %15 = arith.cmpf ole, %10, %14 : vector<512x256xf32>
    %c1073741824_i32 = arith.constant 1073741824 : i32
    %16 = vector.broadcast %c1073741824_i32 : i32 to vector<512x256xi32>
    %17 = arith.select %15, %13, %16 : vector<512x256xi1>, vector<512x256xi32>
    %cst_10 = arith.constant dense<2147483647> : vector<256xi32>
    %18 = vector.multi_reduction <minsi>, %17, %cst_10 [0] : vector<512x256xi32> to vector<256xi32>
    %19 = vector.shape_cast %18 : vector<256xi32> to vector<1x256xi32>
    %c0_11 = arith.constant 0 : index
    %c0_12 = arith.constant 0 : index
    %20 = vector.load %arg5[%c0_11, %c0_12] : memref<1x256xi32, #tpu.memory_space<vmem>>, vector<1x256xi32>
    tpu.vector_store %arg5[%c0_11, %c0_12], %19 {strides = array<i32>} : memref<1x256xi32, #tpu.memory_space<vmem>>, vector<1x256xi32>,
    return
  }
  func.func @transform_0(%arg0: i32) -> (i32, i32) {
    %c0_i32 = arith.constant 0 : i32
    %c0_i32_0 = arith.constant 0 : i32
    return %arg0, %c0_i32 : i32, i32
  }
  func.func @transform_1(%arg0: i32) -> (i32, i32) {
    %c0_i32 = arith.constant 0 : i32
    %c0_i32_0 = arith.constant 0 : i32
    %c0_i32_1 = arith.constant 0 : i32
    return %c0_i32, %c0_i32_0 : i32, i32
  }
  func.func @transform_2(%arg0: i32) -> (i32, i32) {
    %c0_i32 = arith.constant 0 : i32
    %c0_i32_0 = arith.constant 0 : i32
    %c0_i32_1 = arith.constant 0 : i32
    return %c0_i32, %c0_i32_0 : i32, i32
  }
  func.func @transform_3(%arg0: i32) -> (i32, i32) {
    %c0_i32 = arith.constant 0 : i32
    %c0_i32_0 = arith.constant 0 : i32
    return %arg0, %c0_i32 : i32, i32
  }
  func.func @transform_4(%arg0: i32) -> (i32, i32) {
    %c0_i32 = arith.constant 0 : i32
    %c0_i32_0 = arith.constant 0 : i32
    return %c0_i32, %arg0 : i32, i32
  }
}

</mosaic_0001>

<llo_original>
// kernel: tpu_custom_call.1
$region0: #{tpu_custom_call.1}
  #allocation0 [shape = 'u32[]', space=smem, size = 0x4, offset = 0x4, fixed_abs, tag = 'smem constant byte address 0x4 - core index']
  #allocation1 [shape = 'u32[144,128]{1,0:T(1,128)}', space=vmem, size = 0x12000, scoped, tag = 'internal scratch']
  %s0 = inlined_call_operand.vmem [shape: f32[512,128], index: 0, kind: input, shape index: {}]
  %s1 = inlined_call_operand.hbm [shape: f32[512,128], index: 1, kind: input, shape index: {}]
  %s2 = inlined_call_operand.vmem [shape: f32[512,1], index: 2, kind: input, shape index: {}]
  %s3 = inlined_call_operand.hbm [shape: f32[512,128], index: 3, kind: output, shape index: {0}]
  %s4 = inlined_call_operand.hbm [shape: s32[1,512], index: 4, kind: output, shape index: {1}]
  %5 = xla_tuple %s3, %s4
  %s6 = sld [smem:[#allocation0]]
  $region57: #{tpu_custom_call.1} parent=0
    _
  %s8 = ssub.s32 1, %s6
  %s9 = scalar_select 0, %s8, %s6
  $region1: #{tpu_custom_call.1} parent=0
    #allocation2 [shape = 'u8[262144]{0}', space=vmem, size = 0x40000, scoped, tag = 'input window, operand 1, single buffered']
    #allocation3 [shape = 's32[2]{0}', space=sflag, size = 0x8, scoped, tag = 'scoped memory for tpu_custom_call.1']
    #allocation4 [shape = 's32[2]{0}', space=sflag, size = 0x8, scoped, tag = 'scoped memory for tpu_custom_call.1']
    #allocation5 [shape = 'u8[262144]{0}', space=vmem, size = 0x40000, scoped, tag = 'output window, operand 0']
    #allocation6 [shape = 'u8[2048]{0}', space=vmem, size = 0x800, scoped, tag = 'output window, operand 1']
    #allocation7 [shape = 's32[2]{0}', space=sflag, size = 0x8, scoped, tag = 'scoped memory for tpu_custom_call.1']
    %10 = vsyncpa [#allocation3], 0
    %11 = vsyncpa [#allocation4], 0
    %s12 = scalar_lea.sflag [#allocation4], 1
    %13 = vsyncpa %s12, 0
    %14 = vsyncpa [#allocation7], 0
    %s15 = scalar_lea.sflag [#allocation7], 1
    %16 = vsyncpa %s15, 0
    loop: start=0, step=1, limit=4
    $region2: #{tpu_custom_call.1} parent=1 // loop_pre_header
      _
    $region3: #{tpu_custom_call.1} parent=1 // loop_header
      %s18 = sphi 0, %s22
      %p19 = scmp.ge.s32.totalorder %s18, 4
      %s28 = sphi 0, %s30
      %s31 = sphi 0, %s28
      %s32 = sphi 0, %s31
      %s48 = sphi 0, %s32
      %s52 = sphi 0, %s52
      %s54 = sphi 0, %s52
      %s55 = sphi 0, %s54
      %s69 = sphi 0, %s55
      %s73 = sphi 0, %s73
      %s75 = sphi 0, %s73
      %s76 = sphi 0, %s75
      %s90 = sphi 0, %s76
      %s96 = sphi 0, %s98
      %s99 = sphi 0, %s96
      %s100 = sphi 0, %s99
      %s116 = sphi 0, %s100
      %s122 = sphi 0, %s124
      %s125 = sphi 0, %s122
      %s126 = sphi 0, %s125
      %s142 = sphi 0, %s126
    $region4: #{tpu_custom_call.1} parent=1 // loop_header_branch
      %21 = sbr.rel (%p19) target = $region8
    $region5: #{tpu_custom_call.1} parent=1 // loop_body
      %s23 = ssub.s32 %s18, 1
      %s24 = ssub.s32 %s18, 2
      %s25 = sadd.s32 %s18, 1
      %s26 = ssub.s32 %s18, %s25
      %p27 = scmp.eq.s32.totalorder %s26, 0
      %s29 = sadd.s32 %s28, 1
      %s30 = scalar_select %p27, %s28, %s29
      %p33 = pneg %p27
      %p34 = scmp.eq.s32.totalorder %s18, 1
      %p35 = por %p33, %p34
      %p36 = scmp.ne.s32.totalorder %s28, %s31
      %p37 = scmp.eq.s32.totalorder %s18, 0
      %p38 = por %p36, %p37
      %p39 = scmp.ne.s32.totalorder %s28, %s31
      %p40 = scmp.eq.s32.totalorder %s23, 1
      %p41 = por %p39, %p40
      %p42 = scmp.ne.s32.totalorder %s31, %s32
      %p43 = scmp.eq.s32.totalorder %s23, 0
      %p44 = por %p42, %p43
      %p45 = scmp.ne.s32.totalorder %s31, %s32
      %p46 = scmp.eq.s32.totalorder %s24, 1
      %p47 = por %p45, %p46
      %p49 = scmp.ne.s32.totalorder %s32, %s48
      %p50 = scmp.eq.s32.totalorder %s24, 0
      %p51 = por %p49, %p50
      %s53 = sadd.s32 %s52, 1
      %p56 = scmp.eq.s32.totalorder %s18, 1
      %p57 = scmp.ne.s32.totalorder %s52, %s54
      %p58 = scmp.eq.s32.totalorder %s18, 0
      %p59 = por %p57, %p58
      %p60 = scmp.ne.s32.totalorder %s52, %s54
      %p61 = scmp.eq.s32.totalorder %s23, 1
      %p62 = por %p60, %p61
      %p63 = scmp.ne.s32.totalorder %s54, %s55
      %p64 = scmp.eq.s32.totalorder %s23, 0
      %p65 = por %p63, %p64
      %p66 = scmp.ne.s32.totalorder %s54, %s55
      %p67 = scmp.eq.s32.totalorder %s24, 1
      %p68 = por %p66, %p67
      %p70 = scmp.ne.s32.totalorder %s55, %s69
      %p71 = scmp.eq.s32.totalorder %s24, 0
      %p72 = por %p70, %p71
      %s74 = sadd.s32 %s73, 1
      %p77 = scmp.eq.s32.totalorder %s18, 1
      %p78 = scmp.ne.s32.totalorder %s73, %s75
      %p79 = scmp.eq.s32.totalorder %s18, 0
      %p80 = por %p78, %p79
      %p81 = scmp.ne.s32.totalorder %s73, %s75
      %p82 = scmp.eq.s32.totalorder %s23, 1
      %p83 = por %p81, %p82
      %p84 = scmp.ne.s32.totalorder %s75, %s76
      %p85 = scmp.eq.s32.totalorder %s23, 0
      %p86 = por %p84, %p85
      %p87 = scmp.ne.s32.totalorder %s75, %s76
      %p88 = scmp.eq.s32.totalorder %s24, 1
      %p89 = por %p87, %p88
      %p91 = scmp.ne.s32.totalorder %s76, %s90
      %p92 = scmp.eq.s32.totalorder %s24, 0
      %p93 = por %p91, %p92
      %s94 = ssub.s32 %s18, %s25
      %p95 = scmp.eq.s32.totalorder %s94, 0
      %s97 = sadd.s32 %s96, 1
      %s98 = scalar_select %p95, %s96, %s97
      %p101 = pneg %p95
      %p102 = scmp.eq.s32.totalorder %s18, 1
      %p103 = por %p101, %p102
      %p104 = scmp.ne.s32.totalorder %s96, %s99
      %p105 = scmp.eq.s32.totalorder %s18, 0
      %p106 = por %p104, %p105
      %p107 = scmp.ne.s32.totalorder %s96, %s99
      %p108 = scmp.eq.s32.totalorder %s23, 1
      %p109 = por %p107, %p108
      %p110 = scmp.ne.s32.totalorder %s99, %s100
      %p111 = scmp.eq.s32.totalorder %s23, 0
      %p112 = por %p110, %p111
      %p113 = scmp.ne.s32.totalorder %s99, %s100
      %p114 = scmp.eq.s32.totalorder %s24, 1
      %p115 = por %p113, %p114
      %p117 = scmp.ne.s32.totalorder %s100, %s116
      %p118 = scmp.eq.s32.totalorder %s24, 0
      %p119 = por %p117, %p118
      %s120 = ssub.s32 %s18, %s25
      %p121 = scmp.eq.s32.totalorder %s120, 0
      %s123 = sadd.s32 %s122, 1
      %s124 = scalar_select %p121, %s122, %s123
      %p127 = pneg %p121
      %p128 = scmp.eq.s32.totalorder %s18, 1
      %p129 = por %p127, %p128
      %p130 = scmp.ne.s32.totalorder %s122, %s125
      %p131 = scmp.eq.s32.totalorder %s18, 0
      %p132 = por %p130, %p131
      %p133 = scmp.ne.s32.totalorder %s122, %s125
      %p134 = scmp.eq.s32.totalorder %s23, 1
      %p135 = por %p133, %p134
      %p136 = scmp.ne.s32.totalorder %s125, %s126
      %p137 = scmp.eq.s32.totalorder %s23, 0
      %p138 = por %p136, %p137
      %p139 = scmp.ne.s32.totalorder %s125, %s126
      %p140 = scmp.eq.s32.totalorder %s24, 1
      %p141 = por %p139, %p140
      %p143 = scmp.ne.s32.totalorder %s126, %s142
      %p144 = scmp.eq.s32.totalorder %s24, 0
      %p145 = por %p143, %p144
      %p146 = scmp.le.s32.totalorder 1, %s18
      %p147 = scmp.lt.s32.totalorder %s18, 3
      %p148 = pnand %p146, %p147
      %p149 = pneg %p148
      // Predicated region
      $region9: #{tpu_custom_call.1} parent=5 // pred_check
        _
      $region10: #{tpu_custom_call.1} parent=5 // pred_check_branch
        %151 = sbr.rel (%p148) target = $region12
      $region11: #{tpu_custom_call.1} parent=5 // pred_region
        %s152 = ssub.s32 %s18, 1
        // Predicated region
        $region13: #{tpu_custom_call.1} parent=11 // pred_check
          %p153 = pneg %p65
        $region14: #{tpu_custom_call.1} parent=11 // pred_check_branch
          %155 = sbr.rel (%p153) target = $region16
        $region15: #{tpu_custom_call.1} parent=11 // pred_region
          %s157 = ssub.s32 8192, 8192
          %158 = vsyncadd [#allocation3], %s157
          %s159 = sshll.u32 [#allocation2], 4
          %s160 = int_to_ptr.vmem [resolvable:$true] %s159
          %165 = dma.hbm_to_vmem [thread:$0]  %s1, 8192, %s160, [#allocation3], 128, 128, 8
        $region16: #{tpu_custom_call.1} parent=11 // pred_fallthru
          _
        // Predicated region
        $region17: #{tpu_custom_call.1} parent=11 // pred_check
          %p166 = pneg %p86
        $region18: #{tpu_custom_call.1} parent=11 // pred_check_branch
          %168 = sbr.rel (%p166) target = $region20
        $region19: #{tpu_custom_call.1} parent=11 // pred_region
          _
        $region20: #{tpu_custom_call.1} parent=11 // pred_fallthru
          _
      $region12: #{tpu_custom_call.1} parent=5 // pred_fallthru
        _
      %p169 = scmp.lt.s32.totalorder %s18, 2
      // Predicated region
      $region21: #{tpu_custom_call.1} parent=5 // pred_check
        %p170 = pneg %p169
      $region22: #{tpu_custom_call.1} parent=5 // pred_check_branch
        %172 = sbr.rel (%p170) target = $region24
      $region23: #{tpu_custom_call.1} parent=5 // pred_region
        // Predicated region
        $region25: #{tpu_custom_call.1} parent=23 // pred_check
          %p173 = pneg %p38
        $region26: #{tpu_custom_call.1} parent=23 // pred_check_branch
          %175 = sbr.rel (%p173) target = $region28
        $region27: #{tpu_custom_call.1} parent=23 // pred_region
          %s176 = smul.u32 32, %s18
          %p177 = scmp.lt.s32.totalorder %s176, 63
          %s178 = scalar_select %p177, %s176, 63
          %s179 = smul.addr %s178, 8
          %s180 = scalar_lea.vmem %s0, %s179
          %s181 = smul.u32 32, %s18
        $region28: #{tpu_custom_call.1} parent=23 // pred_fallthru
          _
      $region24: #{tpu_custom_call.1} parent=5 // pred_fallthru
        _
      %p182 = scmp.le.s32.totalorder 1, %s18
      %p183 = scmp.lt.s32.totalorder %s18, 3
      %p184 = pnand %p182, %p183
      %p185 = pneg %p184
      // Predicated region
      $region29: #{tpu_custom_call.1} parent=5 // pred_check
        _
      $region30: #{tpu_custom_call.1} parent=5 // pred_check_branch
        %187 = sbr.rel (%p184) target = $region32
      $region31: #{tpu_custom_call.1} parent=5 // pred_region
        %s188 = ssub.s32 %s18, 1
        // Predicated region
        $region33: #{tpu_custom_call.1} parent=31 // pred_check
          %p189 = pneg %p65
        $region34: #{tpu_custom_call.1} parent=31 // pred_check_branch
          %191 = sbr.rel (%p189) target = $region36
        $region35: #{tpu_custom_call.1} parent=31 // pred_region
          %192 = dma.done [#allocation3], 8192
        $region36: #{tpu_custom_call.1} parent=31 // pred_fallthru
          _
        %s193 = smul.u32 32, %s23
        %p194 = scmp.lt.s32.totalorder %s193, 63
        %s195 = scalar_select %p194, %s193, 63
        %s196 = smul.addr %s195, 8
        %s197 = scalar_lea.vmem %s0, %s196
        %p198 = pneg %p44
        %p199 = pneg %p41
        %p200 = pneg %p65
        %p201 = pneg %p62
        %p202 = pneg %p86
        %p203 = pneg %p83
        %p204 = pneg %p112
        %p205 = pneg %p109
        %s206 = sand.u32 %s99, 1
        %s207 = scalar_lea.sflag [#allocation4], %s206
        %s208 = sand.u32 %s99, 1
        %s209 = smul.addr %s208, 256
        %s210 = scalar_lea.vmem [#allocation5], %s209
        %p211 = pneg %p138
        %p212 = pneg %p135
        %s213 = sand.u32 %s125, 1
        %s214 = scalar_lea.sflag [#allocation7], %s213
        %s215 = sand.u32 %s125, 1
        %s216 = smul.addr %s215, 2
        %s217 = scalar_lea.vmem [#allocation6], %s216
        %s218 = smul.u32 32, %s23
        %p219 = scmp.lt.s32.totalorder %s218, 63
        %s220 = scalar_select %p219, %s218, 63
        %s221 = smul.addr %s220, 8
        %s222 = scalar_lea.vmem %s0, %s221
        %s223 = smul.u32 32, %s23
        %s224 = smul.u32 32, %s23
        %s225 = smul.u32 2, %s23
        %v226 = vld [vmem:[%s222] sm:$0xff]
        %v227 = vld [vmem:[%s222 + $0x8] sm:$0xff]
        %v228 = vld [vmem:[%s222 + $0x10] sm:$0xff]
        %v229 = vld [vmem:[%s222 + $0x18] sm:$0xff]
        %v230 = vld [vmem:[%s222 + $0x20] sm:$0xff]
        %v231 = vld [vmem:[%s222 + $0x28] sm:$0xff]
        %v232 = vld [vmem:[%s222 + $0x30] sm:$0xff]
        %v233 = vld [vmem:[%s222 + $0x38] sm:$0xff]
        %v234 = vld [vmem:[%s222 + $0x40] sm:$0xff]
        %v235 = vld [vmem:[%s222 + $0x48] sm:$0xff]
        %v236 = vld [vmem:[%s222 + $0x50] sm:$0xff]
        %v237 = vld [vmem:[%s222 + $0x58] sm:$0xff]
        %v238 = vld [vmem:[%s222 + $0x60] sm:$0xff]
        %v239 = vld [vmem:[%s222 + $0x68] sm:$0xff]
        %v240 = vld [vmem:[%s222 + $0x70] sm:$0xff]
        %v241 = vld [vmem:[%s222 + $0x78] sm:$0xff]
        %v242 = vld [vmem:[%s222 + $0x80] sm:$0xff]
        %v243 = vld [vmem:[%s222 + $0x88] sm:$0xff]
        %v244 = vld [vmem:[%s222 + $0x90] sm:$0xff]
        %v245 = vld [vmem:[%s222 + $0x98] sm:$0xff]
        %v246 = vld [vmem:[%s222 + $0xa0] sm:$0xff]
        %v247 = vld [vmem:[%s222 + $0xa8] sm:$0xff]
        %v248 = vld [vmem:[%s222 + $0xb0] sm:$0xff]
        %v249 = vld [vmem:[%s222 + $0xb8] sm:$0xff]
        %v250 = vld [vmem:[%s222 + $0xc0] sm:$0xff]
        %v251 = vld [vmem:[%s222 + $0xc8] sm:$0xff]
        %v252 = vld [vmem:[%s222 + $0xd0] sm:$0xff]
        %v253 = vld [vmem:[%s222 + $0xd8] sm:$0xff]
        %v254 = vld [vmem:[%s222 + $0xe0] sm:$0xff]
        %v255 = vld [vmem:[%s222 + $0xe8] sm:$0xff]
        %v256 = vld [vmem:[%s222 + $0xf0] sm:$0xff]
        %v257 = vld [vmem:[%s222 + $0xf8] sm:$0xff]
        %v258 = vmul.f32 %v226, 2.0
        %v259 = vmul.f32 %v227, 2.0
        %v260 = vmul.f32 %v228, 2.0
        %v261 = vmul.f32 %v229, 2.0
        %v262 = vmul.f32 %v230, 2.0
        %v263 = vmul.f32 %v231, 2.0
        %v264 = vmul.f32 %v232, 2.0
        %v265 = vmul.f32 %v233, 2.0
        %v266 = vmul.f32 %v234, 2.0
        %v267 = vmul.f32 %v235, 2.0
        %v268 = vmul.f32 %v236, 2.0
        %v269 = vmul.f32 %v237, 2.0
        %v270 = vmul.f32 %v238, 2.0
        %v271 = vmul.f32 %v239, 2.0
        %v272 = vmul.f32 %v240, 2.0
        %v273 = vmul.f32 %v241, 2.0
        %v274 = vmul.f32 %v242, 2.0
        %v275 = vmul.f32 %v243, 2.0
        %v276 = vmul.f32 %v244, 2.0
        %v277 = vmul.f32 %v245, 2.0
        %v278 = vmul.f32 %v246, 2.0
        %v279 = vmul.f32 %v247, 2.0
        %v280 = vmul.f32 %v248, 2.0
        %v281 = vmul.f32 %v249, 2.0
        %v282 = vmul.f32 %v250, 2.0
        %v283 = vmul.f32 %v251, 2.0
        %v284 = vmul.f32 %v252, 2.0
        %v285 = vmul.f32 %v253, 2.0
        %v286 = vmul.f32 %v254, 2.0
        %v287 = vmul.f32 %v255, 2.0
        %v288 = vmul.f32 %v256, 2.0
        %v289 = vmul.f32 %v257, 2.0
        %v290 = vsub.f32 %v258, 1.0
        %v291 = vsub.f32 %v259, 1.0
        %v292 = vsub.f32 %v260, 1.0
        %v293 = vsub.f32 %v261, 1.0
        %v294 = vsub.f32 %v262, 1.0
        %v295 = vsub.f32 %v263, 1.0
        %v296 = vsub.f32 %v264, 1.0
        %v297 = vsub.f32 %v265, 1.0
        %v298 = vsub.f32 %v266, 1.0
        %v299 = vsub.f32 %v267, 1.0
        %v300 = vsub.f32 %v268, 1.0
        %v301 = vsub.f32 %v269, 1.0
        %v302 = vsub.f32 %v270, 1.0
        %v303 = vsub.f32 %v271, 1.0
        %v304 = vsub.f32 %v272, 1.0
        %v305 = vsub.f32 %v273, 1.0
        %v306 = vsub.f32 %v274, 1.0
        %v307 = vsub.f32 %v275, 1.0
        %v308 = vsub.f32 %v276, 1.0
        %v309 = vsub.f32 %v277, 1.0
        %v310 = vsub.f32 %v278, 1.0
        %v311 = vsub.f32 %v279, 1.0
        %v312 = vsub.f32 %v280, 1.0
        %v313 = vsub.f32 %v281, 1.0
        %v314 = vsub.f32 %v282, 1.0
        %v315 = vsub.f32 %v283, 1.0
        %v316 = vsub.f32 %v284, 1.0
        %v317 = vsub.f32 %v285, 1.0
        %v318 = vsub.f32 %v286, 1.0
        %v319 = vsub.f32 %v287, 1.0
        %v320 = vsub.f32 %v288, 1.0
        %v321 = vsub.f32 %v289, 1.0
        %322 = vst [vmem:[%s210] sm:$0xff] %v290
        %323 = vst [vmem:[%s210 + $0x8] sm:$0xff] %v291
        %324 = vst [vmem:[%s210 + $0x10] sm:$0xff] %v292
        %325 = vst [vmem:[%s210 + $0x18] sm:$0xff] %v293
        %326 = vst [vmem:[%s210 + $0x20] sm:$0xff] %v294
        %327 = vst [vmem:[%s210 + $0x28] sm:$0xff] %v295
        %328 = vst [vmem:[%s210 + $0x30] sm:$0xff] %v296
        %329 = vst [vmem:[%s210 + $0x38] sm:$0xff] %v297
        %330 = vst [vmem:[%s210 + $0x40] sm:$0xff] %v298
        %331 = vst [vmem:[%s210 + $0x48] sm:$0xff] %v299
        %332 = vst [vmem:[%s210 + $0x50] sm:$0xff] %v300
        %333 = vst [vmem:[%s210 + $0x58] sm:$0xff] %v301
        %334 = vst [vmem:[%s210 + $0x60] sm:$0xff] %v302
        %335 = vst [vmem:[%s210 + $0x68] sm:$0xff] %v303
        %336 = vst [vmem:[%s210 + $0x70] sm:$0xff] %v304
        %337 = vst [vmem:[%s210 + $0x78] sm:$0xff] %v305
        %338 = vst [vmem:[%s210 + $0x80] sm:$0xff] %v306
        %339 = vst [vmem:[%s210 + $0x88] sm:$0xff] %v307
        %340 = vst [vmem:[%s210 + $0x90] sm:$0xff] %v308
        %341 = vst [vmem:[%s210 + $0x98] sm:$0xff] %v309
        %342 = vst [vmem:[%s210 + $0xa0] sm:$0xff] %v310
        %343 = vst [vmem:[%s210 + $0xa8] sm:$0xff] %v311
        %344 = vst [vmem:[%s210 + $0xb0] sm:$0xff] %v312
        %345 = vst [vmem:[%s210 + $0xb8] sm:$0xff] %v313
        %346 = vst [vmem:[%s210 + $0xc0] sm:$0xff] %v314
        %347 = vst [vmem:[%s210 + $0xc8] sm:$0xff] %v315
        %348 = vst [vmem:[%s210 + $0xd0] sm:$0xff] %v316
        %349 = vst [vmem:[%s210 + $0xd8] sm:$0xff] %v317
        %350 = vst [vmem:[%s210 + $0xe0] sm:$0xff] %v318
        %351 = vst [vmem:[%s210 + $0xe8] sm:$0xff] %v319
        %352 = vst [vmem:[%s210 + $0xf0] sm:$0xff] %v320
        %353 = vst [vmem:[%s210 + $0xf8] sm:$0xff] %v321
        %v354 = vld [vmem:[#allocation2] sm:$0xff]
        %v355 = vld [vmem:[#allocation2 + $0x8] sm:$0xff]
        %v356 = vld [vmem:[#allocation2 + $0x10] sm:$0xff]
        %v357 = vld [vmem:[#allocation2 + $0x18] sm:$0xff]
        %v358 = vld [vmem:[#allocation2 + $0x20] sm:$0xff]
        %v359 = vld [vmem:[#allocation2 + $0x28] sm:$0xff]
        %v360 = vld [vmem:[#allocation2 + $0x30] sm:$0xff]
        %v361 = vld [vmem:[#allocation2 + $0x38] sm:$0xff]
        %v362 = vld [vmem:[#allocation2 + $0x40] sm:$0xff]
        %v363 = vld [vmem:[#allocation2 + $0x48] sm:$0xff]
        %v364 = vld [vmem:[#allocation2 + $0x50] sm:$0xff]
        %v365 = vld [vmem:[#allocation2 + $0x58] sm:$0xff]
        %v366 = vld [vmem:[#allocation2 + $0x60] sm:$0xff]
        %v367 = vld [vmem:[#allocation2 + $0x68] sm:$0xff]
        %v368 = vld [vmem:[#allocation2 + $0x70] sm:$0xff]
        %v369 = vld [vmem:[#allocation2 + $0x78] sm:$0xff]
        %v370 = vld [vmem:[#allocation2 + $0x80] sm:$0xff]
        %v371 = vld [vmem:[#allocation2 + $0x88] sm:$0xff]
        %v372 = vld [vmem:[#allocation2 + $0x90] sm:$0xff]
        %v373 = vld [vmem:[#allocation2 + $0x98] sm:$0xff]
        %v374 = vld [vmem:[#allocation2 + $0xa0] sm:$0xff]
        %v375 = vld [vmem:[#allocation2 + $0xa8] sm:$0xff]
        %v376 = vld [vmem:[#allocation2 + $0xb0] sm:$0xff]
        %v377 = vld [vmem:[#allocation2 + $0xb8] sm:$0xff]
        %v378 = vld [vmem:[#allocation2 + $0xc0] sm:$0xff]
        %v379 = vld [vmem:[#allocation2 + $0xc8] sm:$0xff]
        %v380 = vld [vmem:[#allocation2 + $0xd0] sm:$0xff]
        %v381 = vld [vmem:[#allocation2 + $0xd8] sm:$0xff]
        %v382 = vld [vmem:[#allocation2 + $0xe0] sm:$0xff]
        %v383 = vld [vmem:[#allocation2 + $0xe8] sm:$0xff]
        %v384 = vld [vmem:[#allocation2 + $0xf0] sm:$0xff]
        %v385 = vld [vmem:[#allocation2 + $0xf8] sm:$0xff]
        %v386 = vld [vmem:[#allocation2 + $0x100] sm:$0xff]
        %v387 = vld [vmem:[#allocation2 + $0x108] sm:$0xff]
        %v388 = vld [vmem:[#allocation2 + $0x110] sm:$0xff]
        %v389 = vld [vmem:[#allocation2 + $0x118] sm:$0xff]
        %v390 = vld [vmem:[#allocation2 + $0x120] sm:$0xff]
        %v391 = vld [vmem:[#allocation2 + $0x128] sm:$0xff]
        %v392 = vld [vmem:[#allocation2 + $0x130] sm:$0xff]
        %v393 = vld [vmem:[#allocation2 + $0x138] sm:$0xff]
        %v394 = vld [vmem:[#allocation2 + $0x140] sm:$0xff]
        %v395 = vld [vmem:[#allocation2 + $0x148] sm:$0xff]
        %v396 = vld [vmem:[#allocation2 + $0x150] sm:$0xff]
        %v397 = vld [vmem:[#allocation2 + $0x158] sm:$0xff]
        %v398 = vld [vmem:[#allocation2 + $0x160] sm:$0xff]
        %v399 = vld [vmem:[#allocation2 + $0x168] sm:$0xff]
        %v400 = vld [vmem:[#allocation2 + $0x170] sm:$0xff]
        %v401 = vld [vmem:[#allocation2 + $0x178] sm:$0xff]
        %v402 = vld [vmem:[#allocation2 + $0x180] sm:$0xff]
        %v403 = vld [vmem:[#allocation2 + $0x188] sm:$0xff]
        %v404 = vld [vmem:[#allocation2 + $0x190] sm:$0xff]
        %v405 = vld [vmem:[#allocation2 + $0x198] sm:$0xff]
        %v406 = vld [vmem:[#allocation2 + $0x1a0] sm:$0xff]
        %v407 = vld [vmem:[#allocation2 + $0x1a8] sm:$0xff]
        %v408 = vld [vmem:[#allocation2 + $0x1b0] sm:$0xff]
        %v409 = vld [vmem:[#allocation2 + $0x1b8] sm:$0xff]
        %v410 = vld [vmem:[#allocation2 + $0x1c0] sm:$0xff]
        %v411 = vld [vmem:[#allocation2 + $0x1c8] sm:$0xff]
        %v412 = vld [vmem:[#allocation2 + $0x1d0] sm:$0xff]
        %v413 = vld [vmem:[#allocation2 + $0x1d8] sm:$0xff]
        %v414 = vld [vmem:[#allocation2 + $0x1e0] sm:$0xff]
        %v415 = vld [vmem:[#allocation2 + $0x1e8] sm:$0xff]
        %v416 = vld [vmem:[#allocation2 + $0x1f0] sm:$0xff]
        %v417 = vld [vmem:[#allocation2 + $0x1f8] sm:$0xff]
        %v418 = vld [vmem:[%s2] sm:$0xff]
        %v419 = vld [vmem:[%s2 + $0x8] sm:$0xff]
        %v420 = vld [vmem:[%s2 + $0x10] sm:$0xff]
        %v421 = vld [vmem:[%s2 + $0x18] sm:$0xff]
        %v422 = vld [vmem:[%s2 + $0x20] sm:$0xff]
        %v423 = vld [vmem:[%s2 + $0x28] sm:$0xff]
        %v424 = vld [vmem:[%s2 + $0x30] sm:$0xff]
        %v425 = vld [vmem:[%s2 + $0x38] sm:$0xff]
        %v426 = vld [vmem:[%s2 + $0x40] sm:$0xff]
        %v427 = vld [vmem:[%s2 + $0x48] sm:$0xff]
        %v428 = vld [vmem:[%s2 + $0x50] sm:$0xff]
        %v429 = vld [vmem:[%s2 + $0x58] sm:$0xff]
        %v430 = vld [vmem:[%s2 + $0x60] sm:$0xff]
        %v431 = vld [vmem:[%s2 + $0x68] sm:$0xff]
        %v432 = vld [vmem:[%s2 + $0x70] sm:$0xff]
        %v433 = vld [vmem:[%s2 + $0x78] sm:$0xff]
        %v434 = vld [vmem:[%s2 + $0x80] sm:$0xff]
        %v435 = vld [vmem:[%s2 + $0x88] sm:$0xff]
        %v436 = vld [vmem:[%s2 + $0x90] sm:$0xff]
        %v437 = vld [vmem:[%s2 + $0x98] sm:$0xff]
        %v438 = vld [vmem:[%s2 + $0xa0] sm:$0xff]
        %v439 = vld [vmem:[%s2 + $0xa8] sm:$0xff]
        %v440 = vld [vmem:[%s2 + $0xb0] sm:$0xff]
        %v441 = vld [vmem:[%s2 + $0xb8] sm:$0xff]
        %v442 = vld [vmem:[%s2 + $0xc0] sm:$0xff]
        %v443 = vld [vmem:[%s2 + $0xc8] sm:$0xff]
        %v444 = vld [vmem:[%s2 + $0xd0] sm:$0xff]
        %v445 = vld [vmem:[%s2 + $0xd8] sm:$0xff]
        %v446 = vld [vmem:[%s2 + $0xe0] sm:$0xff]
        %v447 = vld [vmem:[%s2 + $0xe8] sm:$0xff]
        %v448 = vld [vmem:[%s2 + $0xf0] sm:$0xff]
        %v449 = vld [vmem:[%s2 + $0xf8] sm:$0xff]
        %v450 = vld [vmem:[%s2 + $0x100] sm:$0xff]
        %v451 = vld [vmem:[%s2 + $0x108] sm:$0xff]
        %v452 = vld [vmem:[%s2 + $0x110] sm:$0xff]
        %v453 = vld [vmem:[%s2 + $0x118] sm:$0xff]
        %v454 = vld [vmem:[%s2 + $0x120] sm:$0xff]
        %v455 = vld [vmem:[%s2 + $0x128] sm:$0xff]
        %v456 = vld [vmem:[%s2 + $0x130] sm:$0xff]
        %v457 = vld [vmem:[%s2 + $0x138] sm:$0xff]
        %v458 = vld [vmem:[%s2 + $0x140] sm:$0xff]
        %v459 = vld [vmem:[%s2 + $0x148] sm:$0xff]
        %v460 = vld [vmem:[%s2 + $0x150] sm:$0xff]
        %v461 = vld [vmem:[%s2 + $0x158] sm:$0xff]
        %v462 = vld [vmem:[%s2 + $0x160] sm:$0xff]
        %v463 = vld [vmem:[%s2 + $0x168] sm:$0xff]
        %v464 = vld [vmem:[%s2 + $0x170] sm:$0xff]
        %v465 = vld [vmem:[%s2 + $0x178] sm:$0xff]
        %v466 = vld [vmem:[%s2 + $0x180] sm:$0xff]
        %v467 = vld [vmem:[%s2 + $0x188] sm:$0xff]
        %v468 = vld [vmem:[%s2 + $0x190] sm:$0xff]
        %v469 = vld [vmem:[%s2 + $0x198] sm:$0xff]
        %v470 = vld [vmem:[%s2 + $0x1a0] sm:$0xff]
        %v471 = vld [vmem:[%s2 + $0x1a8] sm:$0xff]
        %v472 = vld [vmem:[%s2 + $0x1b0] sm:$0xff]
        %v473 = vld [vmem:[%s2 + $0x1b8] sm:$0xff]
        %v474 = vld [vmem:[%s2 + $0x1c0] sm:$0xff]
        %v475 = vld [vmem:[%s2 + $0x1c8] sm:$0xff]
        %v476 = vld [vmem:[%s2 + $0x1d0] sm:$0xff]
        %v477 = vld [vmem:[%s2 + $0x1d8] sm:$0xff]
        %v478 = vld [vmem:[%s2 + $0x1e0] sm:$0xff]
        %v479 = vld [vmem:[%s2 + $0x1e8] sm:$0xff]
        %v480 = vld [vmem:[%s2 + $0x1f0] sm:$0xff]
        %v481 = vld [vmem:[%s2 + $0x1f8] sm:$0xff]
        %482 = vmatprep.subr.mxu0 0.0
        %483 = vmatpush1.xpose.msra.mxu0 %v290
        %484 = vmatprep.subr.mxu0 0.0
        %485 = vmatpush1.xpose.msra.mxu0 %v291
        %486 = vmatprep.subr.mxu0 0.0
        %487 = vmatpush1.xpose.msra.mxu0 %v292
        %488 = vmatprep.subr.mxu0 0.0
        %489 = vmatpush1.xpose.msra.mxu0 %v293
        %490 = vmatprep.subr.mxu0 0.0
        %491 = vmatpush1.xpose.msra.mxu0 %v294
        %492 = vmatprep.subr.mxu0 0.0
        %493 = vmatpush1.xpose.msra.mxu0 %v295
        %494 = vmatprep.subr.mxu0 0.0
        %495 = vmatpush1.xpose.msra.mxu0 %v296
        %496 = vmatprep.subr.mxu0 0.0
        %497 = vmatpush1.xpose.msra.mxu0 %v297
        %498 = vmatprep.subr.mxu0 0.0
        %499 = vmatpush1.xpose.msra.mxu0 %v298
        %500 = vmatprep.subr.mxu0 0.0
        %501 = vmatpush1.xpose.msra.mxu0 %v299
        %502 = vmatprep.subr.mxu0 0.0
        %503 = vmatpush1.xpose.msra.mxu0 %v300
        %504 = vmatprep.subr.mxu0 0.0
        %505 = vmatpush1.xpose.msra.mxu0 %v301
        %506 = vmatprep.subr.mxu0 0.0
        %507 = vmatpush1.xpose.msra.mxu0 %v302
        %508 = vmatprep.subr.mxu0 0.0
        %509 = vmatpush1.xpose.msra.mxu0 %v303
        %510 = vmatprep.subr.mxu0 0.0
        %511 = vmatpush1.xpose.msra.mxu0 %v304
        %512 = vmatprep.subr.mxu0 0.0
        %513 = vmatpush1.xpose.msra.mxu0 %v305
        %514 = vmatprep.subr.mxu0 0.0
        %515 = vmatpush1.xpose.msra.mxu0 %v306
        %516 = vmatprep.subr.mxu0 0.0
        %517 = vmatpush1.xpose.msra.mxu0 %v307
        %518 = vmatprep.subr.mxu0 0.0
        %519 = vmatpush1.xpose.msra.mxu0 %v308
        %520 = vmatprep.subr.mxu0 0.0
        %521 = vmatpush1.xpose.msra.mxu0 %v309
        %522 = vmatprep.subr.mxu0 0.0
        %523 = vmatpush1.xpose.msra.mxu0 %v310
        %524 = vmatprep.subr.mxu0 0.0
        %525 = vmatpush1.xpose.msra.mxu0 %v311
        %526 = vmatprep.subr.mxu0 0.0
        %527 = vmatpush1.xpose.msra.mxu0 %v312
        %528 = vmatprep.subr.mxu0 0.0
        %529 = vmatpush1.xpose.msra.mxu0 %v313
        %530 = vmatprep.subr.mxu0 0.0
        %531 = vmatpush1.xpose.msra.mxu0 %v314
        %532 = vmatprep.subr.mxu0 0.0
        %533 = vmatpush1.xpose.msra.mxu0 %v315
        %534 = vmatprep.subr.mxu0 0.0
        %535 = vmatpush1.xpose.msra.mxu0 %v316
        %536 = vmatprep.subr.mxu0 0.0
        %537 = vmatpush1.xpose.msra.mxu0 %v317
        %538 = vmatprep.subr.mxu0 0.0
        %539 = vmatpush1.xpose.msra.mxu0 %v318
        %540 = vmatprep.subr.mxu0 0.0
        %541 = vmatpush1.xpose.msra.mxu0 %v319
        %542 = vmatprep.subr.mxu0 0.0
        %543 = vmatpush1.xpose.msra.mxu0 %v320
        %544 = vmatprep.subr.mxu0 0.0
        %545 = vmatpush1.xpose.msra.mxu0 %v321
        %546 = vmatprep.mubr.f32.mxu0 0.0
        %547 = vmatmul.mubr.f32.gmra.mrb[0].mxu0 %v354
        %v548 = vpop.f32.mrb[0].mxu0
        %v549 = vadd.f32 0.0, %v548
        %v550 = vpop.f32.mrb[0].mxu0
        %v551 = vadd.f32 0.0, %v550
        %552 = vmatprep.mubr.f32.mxu0 0.0
        %553 = vmatmul.mubr.f32.gmra.mrb[0].mxu0 %v355
        %v554 = vpop.f32.mrb[0].mxu0
        %v555 = vadd.f32 0.0, %v554
        %v556 = vpop.f32.mrb[0].mxu0
        %v557 = vadd.f32 0.0, %v556
        %558 = vmatprep.mubr.f32.mxu0 0.0
        %559 = vmatmul.mubr.f32.gmra.mrb[0].mxu0 %v356
        %v560 = vpop.f32.mrb[0].mxu0
        %v561 = vadd.f32 0.0, %v560
        %v562 = vpop.f32.mrb[0].mxu0
        %v563 = vadd.f32 0.0, %v562
        %564 = vmatprep.mubr.f32.mxu0 0.0
        %565 = vmatmul.mubr.f32.gmra.mrb[0].mxu0 %v357
        %v566 = vpop.f32.mrb[0].mxu0
        %v567 = vadd.f32 0.0, %v566
        %v568 = vpop.f32.mrb[0].mxu0
        %v569 = vadd.f32 0.0, %v568
        %570 = vmatprep.mubr.f32.mxu0 0.0
        %571 = vmatmul.mubr.f32.gmra.mrb[0].mxu0 %v358
        %v572 = vpop.f32.mrb[0].mxu0
        %v573 = vadd.f32 0.0, %v572
        %v574 = vpop.f32.mrb[0].mxu0
        %v575 = vadd.f32 0.0, %v574
        %576 = vmatprep.mubr.f32.mxu0 0.0
        %577 = vmatmul.mubr.f32.gmra.mrb[0].mxu0 %v359
        %v578 = vpop.f32.mrb[0].mxu0
        %v579 = vadd.f32 0.0, %v578
        %v580 = vpop.f32.mrb[0].mxu0
        %v581 = vadd.f32 0.0, %v580
        %582 = vmatprep.mubr.f32.mxu0 0.0
        %583 = vmatmul.mubr.f32.gmra.mrb[0].mxu0 %v360
        %v584 = vpop.f32.mrb[0].mxu0
        %v585 = vadd.f32 0.0, %v584
        %v586 = vpop.f32.mrb[0].mxu0
        %v587 = vadd.f32 0.0, %v586
        %588 = vmatprep.mubr.f32.mxu0 0.0
        %589 = vmatmul.mubr.f32.gmra.mrb[0].mxu0 %v361
        %v590 = vpop.f32.mrb[0].mxu0
        %v591 = vadd.f32 0.0, %v590
        %v592 = vpop.f32.mrb[0].mxu0
        %v593 = vadd.f32 0.0, %v592
        %594 = vmatprep.mubr.f32.mxu0 0.0
        %595 = vmatmul.mubr.f32.gmra.mrb[0].mxu0 %v362
        %v596 = vpop.f32.mrb[0].mxu0
        %v597 = vadd.f32 0.0, %v596
        %v598 = vpop.f32.mrb[0].mxu0
        %v599 = vadd.f32 0.0, %v598
        %600 = vmatprep.mubr.f32.mxu0 0.0
        %601 = vmatmul.mubr.f32.gmra.mrb[0].mxu0 %v363
        %v602 = vpop.f32.mrb[0].mxu0
        %v603 = vadd.f32 0.0, %v602
        %v604 = vpop.f32.mrb[0].mxu0
        %v605 = vadd.f32 0.0, %v604
        %606 = vmatprep.mubr.f32.mxu0 0.0
        %607 = vmatmul.mubr.f32.gmra.mrb[0].mxu0 %v364
        %v608 = vpop.f32.mrb[0].mxu0
        %v609 = vadd.f32 0.0, %v608
        %v610 = vpop.f32.mrb[0].mxu0
        %v611 = vadd.f32 0.0, %v610
        %612 = vmatprep.mubr.f32.mxu0 0.0
        %613 = vmatmul.mubr.f32.gmra.mrb[0].mxu0 %v365
        %v614 = vpop.f32.mrb[0].mxu0
        %v615 = vadd.f32 0.0, %v614
        %v616 = vpop.f32.mrb[0].mxu0
        %v617 = vadd.f32 0.0, %v616
        %618 = vmatprep.mubr.f32.mxu0 0.0
        %619 = vmatmul.mubr.f32.gmra.mrb[0].mxu0 %v366
        %v620 = vpop.f32.mrb[0].mxu0
        %v621 = vadd.f32 0.0, %v620
        %v622 = vpop.f32.mrb[0].mxu0
        %v623 = vadd.f32 0.0, %v622
        %624 = vmatprep.mubr.f32.mxu0 0.0
        %625 = vmatmul.mubr.f32.gmra.mrb[0].mxu0 %v367
        %v626 = vpop.f32.mrb[0].mxu0
        %v627 = vadd.f32 0.0, %v626
        %v628 = vpop.f32.mrb[0].mxu0
        %v629 = vadd.f32 0.0, %v628
        %630 = vmatprep.mubr.f32.mxu0 0.0
        %631 = vmatmul.mubr.f32.gmra.mrb[0].mxu0 %v368
        %v632 = vpop.f32.mrb[0].mxu0
        %v633 = vadd.f32 0.0, %v632
        %v634 = vpop.f32.mrb[0].mxu0
        %v635 = vadd.f32 0.0, %v634
        %636 = vmatprep.mubr.f32.mxu0 0.0
        %637 = vmatmul.mubr.f32.gmra.mrb[0].mxu0 %v369
        %v638 = vpop.f32.mrb[0].mxu0
        %v639 = vadd.f32 0.0, %v638
        %v640 = vpop.f32.mrb[0].mxu0
        %v641 = vadd.f32 0.0, %v640
        %642 = vmatprep.mubr.f32.mxu0 0.0
        %643 = vmatmul.mubr.f32.gmra.mrb[0].mxu0 %v370
        %v644 = vpop.f32.mrb[0].mxu0
        %v645 = vadd.f32 0.0, %v644
        %v646 = vpop.f32.mrb[0].mxu0
        %v647 = vadd.f32 0.0, %v646
        %648 = vmatprep.mubr.f32.mxu0 0.0
        %649 = vmatmul.mubr.f32.gmra.mrb[0].mxu0 %v371
        %v650 = vpop.f32.mrb[0].mxu0
        %v651 = vadd.f32 0.0, %v650
        %v652 = vpop.f32.mrb[0].mxu0
        %v653 = vadd.f32 0.0, %v652
        %654 = vmatprep.mubr.f32.mxu0 0.0
        %655 = vmatmul.mubr.f32.gmra.mrb[0].mxu0 %v372
        %v656 = vpop.f32.mrb[0].mxu0
        %v657 = vadd.f32 0.0, %v656
        %v658 = vpop.f32.mrb[0].mxu0
        %v659 = vadd.f32 0.0, %v658
        %660 = vmatprep.mubr.f32.mxu0 0.0
        %661 = vmatmul.mubr.f32.gmra.mrb[0].mxu0 %v373
        %v662 = vpop.f32.mrb[0].mxu0
        %v663 = vadd.f32 0.0, %v662
        %v664 = vpop.f32.mrb[0].mxu0
        %v665 = vadd.f32 0.0, %v664
        %666 = vmatprep.mubr.f32.mxu0 0.0
        %667 = vmatmul.mubr.f32.gmra.mrb[0].mxu0 %v374
        %v668 = vpop.f32.mrb[0].mxu0
        %v669 = vadd.f32 0.0, %v668
        %v670 = vpop.f32.mrb[0].mxu0
        %v671 = vadd.f32 0.0, %v670
        %672 = vmatprep.mubr.f32.mxu0 0.0
        %673 = vmatmul.mubr.f32.gmra.mrb[0].mxu0 %v375
        %v674 = vpop.f32.mrb[0].mxu0
        %v675 = vadd.f32 0.0, %v674
        %v676 = vpop.f32.mrb[0].mxu0
        %v677 = vadd.f32 0.0, %v676
        %678 = vmatprep.mubr.f32.mxu0 0.0
        %679 = vmatmul.mubr.f32.gmra.mrb[0].mxu0 %v376
        %v680 = vpop.f32.mrb[0].mxu0
        %v681 = vadd.f32 0.0, %v680
        %v682 = vpop.f32.mrb[0].mxu0
        %v683 = vadd.f32 0.0, %v682
        %684 = vmatprep.mubr.f32.mxu0 0.0
        %685 = vmatmul.mubr.f32.gmra.mrb[0].mxu0 %v377
        %v686 = vpop.f32.mrb[0].mxu0
        %v687 = vadd.f32 0.0, %v686
        %v688 = vpop.f32.mrb[0].mxu0
        %v689 = vadd.f32 0.0, %v688
        %690 = vmatprep.mubr.f32.mxu0 0.0
        %691 = vmatmul.mubr.f32.gmra.mrb[0].mxu0 %v378
        %v692 = vpop.f32.mrb[0].mxu0
        %v693 = vadd.f32 0.0, %v692
        %v694 = vpop.f32.mrb[0].mxu0
        %v695 = vadd.f32 0.0, %v694
        %696 = vmatprep.mubr.f32.mxu0 0.0
        %697 = vmatmul.mubr.f32.gmra.mrb[0].mxu0 %v379
        %v698 = vpop.f32.mrb[0].mxu0
        %v699 = vadd.f32 0.0, %v698
        %v700 = vpop.f32.mrb[0].mxu0
        %v701 = vadd.f32 0.0, %v700
        %702 = vmatprep.mubr.f32.mxu0 0.0
        %703 = vmatmul.mubr.f32.gmra.mrb[0].mxu0 %v380
        %v704 = vpop.f32.mrb[0].mxu0
        %v705 = vadd.f32 0.0, %v704
        %v706 = vpop.f32.mrb[0].mxu0
        %v707 = vadd.f32 0.0, %v706
        %708 = vmatprep.mubr.f32.mxu0 0.0
        %709 = vmatmul.mubr.f32.gmra.mrb[0].mxu0 %v381
        %v710 = vpop.f32.mrb[0].mxu0
        %v711 = vadd.f32 0.0, %v710
        %v712 = vpop.f32.mrb[0].mxu0
        %v713 = vadd.f32 0.0, %v712
        %714 = vmatprep.mubr.f32.mxu0 0.0
        %715 = vmatmul.mubr.f32.gmra.mrb[0].mxu0 %v382
        %v716 = vpop.f32.mrb[0].mxu0
        %v717 = vadd.f32 0.0, %v716
        %v718 = vpop.f32.mrb[0].mxu0
        %v719 = vadd.f32 0.0, %v718
        %720 = vmatprep.mubr.f32.mxu0 0.0
        %721 = vmatmul.mubr.f32.gmra.mrb[0].mxu0 %v383
        %v722 = vpop.f32.mrb[0].mxu0
        %v723 = vadd.f32 0.0, %v722
        %v724 = vpop.f32.mrb[0].mxu0
        %v725 = vadd.f32 0.0, %v724
        %726 = vmatprep.mubr.f32.mxu0 0.0
        %727 = vmatmul.mubr.f32.gmra.mrb[0].mxu0 %v384
        %v728 = vpop.f32.mrb[0].mxu0
        %v729 = vadd.f32 0.0, %v728
        %v730 = vpop.f32.mrb[0].mxu0
        %v731 = vadd.f32 0.0, %v730
        %732 = vmatprep.mubr.f32.mxu0 0.0
        %733 = vmatmul.mubr.f32.gmra.mrb[0].mxu0 %v385
        %v734 = vpop.f32.mrb[0].mxu0
        %v735 = vadd.f32 0.0, %v734
        %v736 = vpop.f32.mrb[0].mxu0
        %v737 = vadd.f32 0.0, %v736
        %738 = vmatprep.mubr.f32.mxu0 0.0
        %739 = vmatmul.mubr.f32.gmra.mrb[0].mxu0 %v386
        %v740 = vpop.f32.mrb[0].mxu0
        %v741 = vadd.f32 0.0, %v740
        %v742 = vpop.f32.mrb[0].mxu0
        %v743 = vadd.f32 0.0, %v742
        %744 = vmatprep.mubr.f32.mxu0 0.0
        %745 = vmatmul.mubr.f32.gmra.mrb[0].mxu0 %v387
        %v746 = vpop.f32.mrb[0].mxu0
        %v747 = vadd.f32 0.0, %v746
        %v748 = vpop.f32.mrb[0].mxu0
        %v749 = vadd.f32 0.0, %v748
        %750 = vmatprep.mubr.f32.mxu0 0.0
        %751 = vmatmul.mubr.f32.gmra.mrb[0].mxu0 %v388
        %v752 = vpop.f32.mrb[0].mxu0
        %v753 = vadd.f32 0.0, %v752
        %v754 = vpop.f32.mrb[0].mxu0
        %v755 = vadd.f32 0.0, %v754
        %756 = vmatprep.mubr.f32.mxu0 0.0
        %757 = vmatmul.mubr.f32.gmra.mrb[0].mxu0 %v389
        %v758 = vpop.f32.mrb[0].mxu0
        %v759 = vadd.f32 0.0, %v758
        %v760 = vpop.f32.mrb[0].mxu0
        %v761 = vadd.f32 0.0, %v760
        %762 = vmatprep.mubr.f32.mxu0 0.0
        %763 = vmatmul.mubr.f32.gmra.mrb[0].mxu0 %v390
        %v764 = vpop.f32.mrb[0].mxu0
        %v765 = vadd.f32 0.0, %v764
        %v766 = vpop.f32.mrb[0].mxu0
        %v767 = vadd.f32 0.0, %v766
        %768 = vmatprep.mubr.f32.mxu0 0.0
        %769 = vmatmul.mubr.f32.gmra.mrb[0].mxu0 %v391
        %v770 = vpop.f32.mrb[0].mxu0
        %v771 = vadd.f32 0.0, %v770
        %v772 = vpop.f32.mrb[0].mxu0
        %v773 = vadd.f32 0.0, %v772
        %774 = vmatprep.mubr.f32.mxu0 0.0
        %775 = vmatmul.mubr.f32.gmra.mrb[0].mxu0 %v392
        %v776 = vpop.f32.mrb[0].mxu0
        %v777 = vadd.f32 0.0, %v776
        %v778 = vpop.f32.mrb[0].mxu0
        %v779 = vadd.f32 0.0, %v778
        %780 = vmatprep.mubr.f32.mxu0 0.0
        %781 = vmatmul.mubr.f32.gmra.mrb[0].mxu0 %v393
        %v782 = vpop.f32.mrb[0].mxu0
        %v783 = vadd.f32 0.0, %v782
        %v784 = vpop.f32.mrb[0].mxu0
        %v785 = vadd.f32 0.0, %v784
        %786 = vmatprep.mubr.f32.mxu0 0.0
        %787 = vmatmul.mubr.f32.gmra.mrb[0].mxu0 %v394
        %v788 = vpop.f32.mrb[0].mxu0
        %v789 = vadd.f32 0.0, %v788
        %v790 = vpop.f32.mrb[0].mxu0
        %v791 = vadd.f32 0.0, %v790
        %792 = vmatprep.mubr.f32.mxu0 0.0
        %793 = vmatmul.mubr.f32.gmra.mrb[0].mxu0 %v395
        %v794 = vpop.f32.mrb[0].mxu0
        %v795 = vadd.f32 0.0, %v794
        %v796 = vpop.f32.mrb[0].mxu0
        %v797 = vadd.f32 0.0, %v796
        %798 = vmatprep.mubr.f32.mxu0 0.0
        %799 = vmatmul.mubr.f32.gmra.mrb[0].mxu0 %v396
        %v800 = vpop.f32.mrb[0].mxu0
        %v801 = vadd.f32 0.0, %v800
        %v802 = vpop.f32.mrb[0].mxu0
        %v803 = vadd.f32 0.0, %v802
        %804 = vmatprep.mubr.f32.mxu0 0.0
        %805 = vmatmul.mubr.f32.gmra.mrb[0].mxu0 %v397
        %v806 = vpop.f32.mrb[0].mxu0
        %v807 = vadd.f32 0.0, %v806
        %v808 = vpop.f32.mrb[0].mxu0
        %v809 = vadd.f32 0.0, %v808
        %810 = vmatprep.mubr.f32.mxu0 0.0
        %811 = vmatmul.mubr.f32.gmra.mrb[0].mxu0 %v398
        %v812 = vpop.f32.mrb[0].mxu0
        %v813 = vadd.f32 0.0, %v812
        %v814 = vpop.f32.mrb[0].mxu0
        %v815 = vadd.f32 0.0, %v814
        %816 = vmatprep.mubr.f32.mxu0 0.0
        %817 = vmatmul.mubr.f32.gmra.mrb[0].mxu0 %v399
        %v818 = vpop.f32.mrb[0].mxu0
        %v819 = vadd.f32 0.0, %v818
        %v820 = vpop.f32.mrb[0].mxu0
        %v821 = vadd.f32 0.0, %v820
        %822 = vmatprep.mubr.f32.mxu0 0.0
        %823 = vmatmul.mubr.f32.gmra.mrb[0].mxu0 %v400
        %v824 = vpop.f32.mrb[0].mxu0
        %v825 = vadd.f32 0.0, %v824
        %v826 = vpop.f32.mrb[0].mxu0
        %v827 = vadd.f32 0.0, %v826
        %828 = vmatprep.mubr.f32.mxu0 0.0
        %829 = vmatmul.mubr.f32.gmra.mrb[0].mxu0 %v401
        %v830 = vpop.f32.mrb[0].mxu0
        %v831 = vadd.f32 0.0, %v830
        %v832 = vpop.f32.mrb[0].mxu0
        %v833 = vadd.f32 0.0, %v832
        %834 = vmatprep.mubr.f32.mxu0 0.0
        %835 = vmatmul.mubr.f32.gmra.mrb[0].mxu0 %v402
        %v836 = vpop.f32.mrb[0].mxu0
        %v837 = vadd.f32 0.0, %v836
        %v838 = vpop.f32.mrb[0].mxu0
        %v839 = vadd.f32 0.0, %v838
        %840 = vmatprep.mubr.f32.mxu0 0.0
        %841 = vmatmul.mubr.f32.gmra.mrb[0].mxu0 %v403
        %v842 = vpop.f32.mrb[0].mxu0
        %v843 = vadd.f32 0.0, %v842
        %v844 = vpop.f32.mrb[0].mxu0
        %v845 = vadd.f32 0.0, %v844
        %846 = vmatprep.mubr.f32.mxu0 0.0
        %847 = vmatmul.mubr.f32.gmra.mrb[0].mxu0 %v404
        %v848 = vpop.f32.mrb[0].mxu0
        %v849 = vadd.f32 0.0, %v848
        %v850 = vpop.f32.mrb[0].mxu0
        %v851 = vadd.f32 0.0, %v850
        %852 = vmatprep.mubr.f32.mxu0 0.0
        %853 = vmatmul.mubr.f32.gmra.mrb[0].mxu0 %v405
        %v854 = vpop.f32.mrb[0].mxu0
        %v855 = vadd.f32 0.0, %v854
        %v856 = vpop.f32.mrb[0].mxu0
        %v857 = vadd.f32 0.0, %v856
        %858 = vmatprep.mubr.f32.mxu0 0.0
        %859 = vmatmul.mubr.f32.gmra.mrb[0].mxu0 %v406
        %v860 = vpop.f32.mrb[0].mxu0
        %v861 = vadd.f32 0.0, %v860
        %v862 = vpop.f32.mrb[0].mxu0
        %v863 = vadd.f32 0.0, %v862
        %864 = vmatprep.mubr.f32.mxu0 0.0
        %865 = vmatmul.mubr.f32.gmra.mrb[0].mxu0 %v407
        %v866 = vpop.f32.mrb[0].mxu0
        %v867 = vadd.f32 0.0, %v866
        %v868 = vpop.f32.mrb[0].mxu0
        %v869 = vadd.f32 0.0, %v868
        %870 = vmatprep.mubr.f32.mxu0 0.0
        %871 = vmatmul.mubr.f32.gmra.mrb[0].mxu0 %v408
        %v872 = vpop.f32.mrb[0].mxu0
        %v873 = vadd.f32 0.0, %v872
        %v874 = vpop.f32.mrb[0].mxu0
        %v875 = vadd.f32 0.0, %v874
        %876 = vmatprep.mubr.f32.mxu0 0.0
        %877 = vmatmul.mubr.f32.gmra.mrb[0].mxu0 %v409
        %v878 = vpop.f32.mrb[0].mxu0
        %v879 = vadd.f32 0.0, %v878
        %v880 = vpop.f32.mrb[0].mxu0
        %v881 = vadd.f32 0.0, %v880
        %882 = vmatprep.mubr.f32.mxu0 0.0
        %883 = vmatmul.mubr.f32.gmra.mrb[0].mxu0 %v410
        %v884 = vpop.f32.mrb[0].mxu0
        %v885 = vadd.f32 0.0, %v884
        %v886 = vpop.f32.mrb[0].mxu0
        %v887 = vadd.f32 0.0, %v886
        %888 = vmatprep.mubr.f32.mxu0 0.0
        %889 = vmatmul.mubr.f32.gmra.mrb[0].mxu0 %v411
        %v890 = vpop.f32.mrb[0].mxu0
        %v891 = vadd.f32 0.0, %v890
        %v892 = vpop.f32.mrb[0].mxu0
        %v893 = vadd.f32 0.0, %v892
        %894 = vmatprep.mubr.f32.mxu0 0.0
        %895 = vmatmul.mubr.f32.gmra.mrb[0].mxu0 %v412
        %v896 = vpop.f32.mrb[0].mxu0
        %v897 = vadd.f32 0.0, %v896
        %v898 = vpop.f32.mrb[0].mxu0
        %v899 = vadd.f32 0.0, %v898
        %900 = vmatprep.mubr.f32.mxu0 0.0
        %901 = vmatmul.mubr.f32.gmra.mrb[0].mxu0 %v413
        %v902 = vpop.f32.mrb[0].mxu0
        %v903 = vadd.f32 0.0, %v902
        %v904 = vpop.f32.mrb[0].mxu0
        %v905 = vadd.f32 0.0, %v904
        %906 = vmatprep.mubr.f32.mxu0 0.0
        %907 = vmatmul.mubr.f32.gmra.mrb[0].mxu0 %v414
        %v908 = vpop.f32.mrb[0].mxu0
        %v909 = vadd.f32 0.0, %v908
        %v910 = vpop.f32.mrb[0].mxu0
        %v911 = vadd.f32 0.0, %v910
        %912 = vmatprep.mubr.f32.mxu0 0.0
        %913 = vmatmul.mubr.f32.gmra.mrb[0].mxu0 %v415
        %v914 = vpop.f32.mrb[0].mxu0
        %v915 = vadd.f32 0.0, %v914
        %v916 = vpop.f32.mrb[0].mxu0
        %v917 = vadd.f32 0.0, %v916
        %918 = vmatprep.mubr.f32.mxu0 0.0
        %919 = vmatmul.mubr.f32.gmra.mrb[0].mxu0 %v416
        %v920 = vpop.f32.mrb[0].mxu0
        %v921 = vadd.f32 0.0, %v920
        %v922 = vpop.f32.mrb[0].mxu0
        %v923 = vadd.f32 0.0, %v922
        %924 = vmatprep.mubr.f32.mxu0 0.0
        %925 = vmatmul.mubr.f32.gmra.mrb[0].mxu0 %v417
        %v926 = vpop.f32.mrb[0].mxu0
        %v927 = vadd.f32 0.0, %v926
        %v928 = vpop.f32.mrb[0].mxu0
        %v929 = vadd.f32 0.0, %v928
        %930 = vdwg.mxu0
        %932 = vset.pattern.permute.xlu0 0
        %933 = vperm.xlu0 %932, %v418
        %v934 = vpop.permute.xlu0 %933
        %937 = vset.pattern.permute.xlu0 0
        %938 = vperm.xlu0 %937, %v419
        %v939 = vpop.permute.xlu0 %938
        %942 = vset.pattern.permute.xlu0 0
        %943 = vperm.xlu0 %942, %v420
        %v944 = vpop.permute.xlu0 %943
        %947 = vset.pattern.permute.xlu0 0
        %948 = vperm.xlu0 %947, %v421
        %v949 = vpop.permute.xlu0 %948
        %952 = vset.pattern.permute.xlu0 0
        %953 = vperm.xlu0 %952, %v422
        %v954 = vpop.permute.xlu0 %953
        %957 = vset.pattern.permute.xlu0 0
        %958 = vperm.xlu0 %957, %v423
        %v959 = vpop.permute.xlu0 %958
        %962 = vset.pattern.permute.xlu0 0
        %963 = vperm.xlu0 %962, %v424
        %v964 = vpop.permute.xlu0 %963
        %967 = vset.pattern.permute.xlu0 0
        %968 = vperm.xlu0 %967, %v425
        %v969 = vpop.permute.xlu0 %968
        %972 = vset.pattern.permute.xlu0 0
        %973 = vperm.xlu0 %972, %v426
        %v974 = vpop.permute.xlu0 %973
        %977 = vset.pattern.permute.xlu0 0
        %978 = vperm.xlu0 %977, %v427
        %v979 = vpop.permute.xlu0 %978
        %982 = vset.pattern.permute.xlu0 0
        %983 = vperm.xlu0 %982, %v428
        %v984 = vpop.permute.xlu0 %983
        %987 = vset.pattern.permute.xlu0 0
        %988 = vperm.xlu0 %987, %v429
        %v989 = vpop.permute.xlu0 %988
        %992 = vset.pattern.permute.xlu0 0
        %993 = vperm.xlu0 %992, %v430
        %v994 = vpop.permute.xlu0 %993
        %997 = vset.pattern.permute.xlu0 0
        %998 = vperm.xlu0 %997, %v431
        %v999 = vpop.permute.xlu0 %998
        %1002 = vset.pattern.permute.xlu0 0
        %1003 = vperm.xlu0 %1002, %v432
        %v1004 = vpop.permute.xlu0 %1003
        %1007 = vset.pattern.permute.xlu0 0
        %1008 = vperm.xlu0 %1007, %v433
        %v1009 = vpop.permute.xlu0 %1008
        %1012 = vset.pattern.permute.xlu0 0
        %1013 = vperm.xlu0 %1012, %v434
        %v1014 = vpop.permute.xlu0 %1013
        %1017 = vset.pattern.permute.xlu0 0
        %1018 = vperm.xlu0 %1017, %v435
        %v1019 = vpop.permute.xlu0 %1018
        %1022 = vset.pattern.permute.xlu0 0
        %1023 = vperm.xlu0 %1022, %v436
        %v1024 = vpop.permute.xlu0 %1023
        %1027 = vset.pattern.permute.xlu0 0
        %1028 = vperm.xlu0 %1027, %v437
        %v1029 = vpop.permute.xlu0 %1028
        %1032 = vset.pattern.permute.xlu0 0
        %1033 = vperm.xlu0 %1032, %v438
        %v1034 = vpop.permute.xlu0 %1033
        %1037 = vset.pattern.permute.xlu0 0
        %1038 = vperm.xlu0 %1037, %v439
        %v1039 = vpop.permute.xlu0 %1038
        %1042 = vset.pattern.permute.xlu0 0
        %1043 = vperm.xlu0 %1042, %v440
        %v1044 = vpop.permute.xlu0 %1043
        %1047 = vset.pattern.permute.xlu0 0
        %1048 = vperm.xlu0 %1047, %v441
        %v1049 = vpop.permute.xlu0 %1048
        %1052 = vset.pattern.permute.xlu0 0
        %1053 = vperm.xlu0 %1052, %v442
        %v1054 = vpop.permute.xlu0 %1053
        %1057 = vset.pattern.permute.xlu0 0
        %1058 = vperm.xlu0 %1057, %v443
        %v1059 = vpop.permute.xlu0 %1058
        %1062 = vset.pattern.permute.xlu0 0
        %1063 = vperm.xlu0 %1062, %v444
        %v1064 = vpop.permute.xlu0 %1063
        %1067 = vset.pattern.permute.xlu0 0
        %1068 = vperm.xlu0 %1067, %v445
        %v1069 = vpop.permute.xlu0 %1068
        %1072 = vset.pattern.permute.xlu0 0
        %1073 = vperm.xlu0 %1072, %v446
        %v1074 = vpop.permute.xlu0 %1073
        %1077 = vset.pattern.permute.xlu0 0
        %1078 = vperm.xlu0 %1077, %v447
        %v1079 = vpop.permute.xlu0 %1078
        %1082 = vset.pattern.permute.xlu0 0
        %1083 = vperm.xlu0 %1082, %v448
        %v1084 = vpop.permute.xlu0 %1083
        %1087 = vset.pattern.permute.xlu0 0
        %1088 = vperm.xlu0 %1087, %v449
        %v1089 = vpop.permute.xlu0 %1088
        %1092 = vset.pattern.permute.xlu0 0
        %1093 = vperm.xlu0 %1092, %v450
        %v1094 = vpop.permute.xlu0 %1093
        %1097 = vset.pattern.permute.xlu0 0
        %1098 = vperm.xlu0 %1097, %v451
        %v1099 = vpop.permute.xlu0 %1098
        %1102 = vset.pattern.permute.xlu0 0
        %1103 = vperm.xlu0 %1102, %v452
        %v1104 = vpop.permute.xlu0 %1103
        %1107 = vset.pattern.permute.xlu0 0
        %1108 = vperm.xlu0 %1107, %v453
        %v1109 = vpop.permute.xlu0 %1108
        %1112 = vset.pattern.permute.xlu0 0
        %1113 = vperm.xlu0 %1112, %v454
        %v1114 = vpop.permute.xlu0 %1113
        %1117 = vset.pattern.permute.xlu0 0
        %1118 = vperm.xlu0 %1117, %v455
        %v1119 = vpop.permute.xlu0 %1118
        %1122 = vset.pattern.permute.xlu0 0
        %1123 = vperm.xlu0 %1122, %v456
        %v1124 = vpop.permute.xlu0 %1123
        %1127 = vset.pattern.permute.xlu0 0
        %1128 = vperm.xlu0 %1127, %v457
        %v1129 = vpop.permute.xlu0 %1128
        %1132 = vset.pattern.permute.xlu0 0
        %1133 = vperm.xlu0 %1132, %v458
        %v1134 = vpop.permute.xlu0 %1133
        %1137 = vset.pattern.permute.xlu0 0
        %1138 = vperm.xlu0 %1137, %v459
        %v1139 = vpop.permute.xlu0 %1138
        %1142 = vset.pattern.permute.xlu0 0
        %1143 = vperm.xlu0 %1142, %v460
        %v1144 = vpop.permute.xlu0 %1143
        %1147 = vset.pattern.permute.xlu0 0
        %1148 = vperm.xlu0 %1147, %v461
        %v1149 = vpop.permute.xlu0 %1148
        %1152 = vset.pattern.permute.xlu0 0
        %1153 = vperm.xlu0 %1152, %v462
        %v1154 = vpop.permute.xlu0 %1153
        %1157 = vset.pattern.permute.xlu0 0
        %1158 = vperm.xlu0 %1157, %v463
        %v1159 = vpop.permute.xlu0 %1158
        %1162 = vset.pattern.permute.xlu0 0
        %1163 = vperm.xlu0 %1162, %v464
        %v1164 = vpop.permute.xlu0 %1163
        %1167 = vset.pattern.permute.xlu0 0
        %1168 = vperm.xlu0 %1167, %v465
        %v1169 = vpop.permute.xlu0 %1168
        %1172 = vset.pattern.permute.xlu0 0
        %1173 = vperm.xlu0 %1172, %v466
        %v1174 = vpop.permute.xlu0 %1173
        %1177 = vset.pattern.permute.xlu0 0
        %1178 = vperm.xlu0 %1177, %v467
        %v1179 = vpop.permute.xlu0 %1178
        %1182 = vset.pattern.permute.xlu0 0
        %1183 = vperm.xlu0 %1182, %v468
        %v1184 = vpop.permute.xlu0 %1183
        %1187 = vset.pattern.permute.xlu0 0
        %1188 = vperm.xlu0 %1187, %v469
        %v1189 = vpop.permute.xlu0 %1188
        %1192 = vset.pattern.permute.xlu0 0
        %1193 = vperm.xlu0 %1192, %v470
        %v1194 = vpop.permute.xlu0 %1193
        %1197 = vset.pattern.permute.xlu0 0
        %1198 = vperm.xlu0 %1197, %v471
        %v1199 = vpop.permute.xlu0 %1198
        %1202 = vset.pattern.permute.xlu0 0
        %1203 = vperm.xlu0 %1202, %v472
        %v1204 = vpop.permute.xlu0 %1203
        %1207 = vset.pattern.permute.xlu0 0
        %1208 = vperm.xlu0 %1207, %v473
        %v1209 = vpop.permute.xlu0 %1208
        %1212 = vset.pattern.permute.xlu0 0
        %1213 = vperm.xlu0 %1212, %v474
        %v1214 = vpop.permute.xlu0 %1213
        %1217 = vset.pattern.permute.xlu0 0
        %1218 = vperm.xlu0 %1217, %v475
        %v1219 = vpop.permute.xlu0 %1218
        %1222 = vset.pattern.permute.xlu0 0
        %1223 = vperm.xlu0 %1222, %v476
        %v1224 = vpop.permute.xlu0 %1223
        %1227 = vset.pattern.permute.xlu0 0
        %1228 = vperm.xlu0 %1227, %v477
        %v1229 = vpop.permute.xlu0 %1228
        %1232 = vset.pattern.permute.xlu0 0
        %1233 = vperm.xlu0 %1232, %v478
        %v1234 = vpop.permute.xlu0 %1233
        %1237 = vset.pattern.permute.xlu0 0
        %1238 = vperm.xlu0 %1237, %v479
        %v1239 = vpop.permute.xlu0 %1238
        %1242 = vset.pattern.permute.xlu0 0
        %1243 = vperm.xlu0 %1242, %v480
        %v1244 = vpop.permute.xlu0 %1243
        %1247 = vset.pattern.permute.xlu0 0
        %1248 = vperm.xlu0 %1247, %v481
        %v1249 = vpop.permute.xlu0 %1248
        %v1251 = vsub.f32 %v934, %v549
        %v1252 = vsub.f32 %v934, %v551
        %v1253 = vsub.f32 %v939, %v555
        %v1254 = vsub.f32 %v939, %v557
        %v1255 = vsub.f32 %v944, %v561
        %v1256 = vsub.f32 %v944, %v563
        %v1257 = vsub.f32 %v949, %v567
        %v1258 = vsub.f32 %v949, %v569
        %v1259 = vsub.f32 %v954, %v573
        %v1260 = vsub.f32 %v954, %v575
        %v1261 = vsub.f32 %v959, %v579
        %v1262 = vsub.f32 %v959, %v581
        %v1263 = vsub.f32 %v964, %v585
        %v1264 = vsub.f32 %v964, %v587
        %v1265 = vsub.f32 %v969, %v591
        %v1266 = vsub.f32 %v969, %v593
        %v1267 = vsub.f32 %v974, %v597
        %v1268 = vsub.f32 %v974, %v599
        %v1269 = vsub.f32 %v979, %v603
        %v1270 = vsub.f32 %v979, %v605
        %v1271 = vsub.f32 %v984, %v609
        %v1272 = vsub.f32 %v984, %v611
        %v1273 = vsub.f32 %v989, %v615
        %v1274 = vsub.f32 %v989, %v617
        %v1275 = vsub.f32 %v994, %v621
        %v1276 = vsub.f32 %v994, %v623
        %v1277 = vsub.f32 %v999, %v627
        %v1278 = vsub.f32 %v999, %v629
        %v1279 = vsub.f32 %v1004, %v633
        %v1280 = vsub.f32 %v1004, %v635
        %v1281 = vsub.f32 %v1009, %v639
        %v1282 = vsub.f32 %v1009, %v641
        %v1283 = vsub.f32 %v1014, %v645
        %v1284 = vsub.f32 %v1014, %v647
        %v1285 = vsub.f32 %v1019, %v651
        %v1286 = vsub.f32 %v1019, %v653
        %v1287 = vsub.f32 %v1024, %v657
        %v1288 = vsub.f32 %v1024, %v659
        %v1289 = vsub.f32 %v1029, %v663
        %v1290 = vsub.f32 %v1029, %v665
        %v1291 = vsub.f32 %v1034, %v669
        %v1292 = vsub.f32 %v1034, %v671
        %v1293 = vsub.f32 %v1039, %v675
        %v1294 = vsub.f32 %v1039, %v677
        %v1295 = vsub.f32 %v1044, %v681
        %v1296 = vsub.f32 %v1044, %v683
        %v1297 = vsub.f32 %v1049, %v687
        %v1298 = vsub.f32 %v1049, %v689
        %v1299 = vsub.f32 %v1054, %v693
        %v1300 = vsub.f32 %v1054, %v695
        %v1301 = vsub.f32 %v1059, %v699
        %v1302 = vsub.f32 %v1059, %v701
        %v1303 = vsub.f32 %v1064, %v705
        %v1304 = vsub.f32 %v1064, %v707
        %v1305 = vsub.f32 %v1069, %v711
        %v1306 = vsub.f32 %v1069, %v713
        %v1307 = vsub.f32 %v1074, %v717
        %v1308 = vsub.f32 %v1074, %v719
        %v1309 = vsub.f32 %v1079, %v723
        %v1310 = vsub.f32 %v1079, %v725
        %v1311 = vsub.f32 %v1084, %v729
        %v1312 = vsub.f32 %v1084, %v731
        %v1313 = vsub.f32 %v1089, %v735
        %v1314 = vsub.f32 %v1089, %v737
        %v1315 = vsub.f32 %v1094, %v741
        %v1316 = vsub.f32 %v1094, %v743
        %v1317 = vsub.f32 %v1099, %v747
        %v1318 = vsub.f32 %v1099, %v749
        %v1319 = vsub.f32 %v1104, %v753
        %v1320 = vsub.f32 %v1104, %v755
        %v1321 = vsub.f32 %v1109, %v759
        %v1322 = vsub.f32 %v1109, %v761
        %v1323 = vsub.f32 %v1114, %v765
        %v1324 = vsub.f32 %v1114, %v767
        %v1325 = vsub.f32 %v1119, %v771
        %v1326 = vsub.f32 %v1119, %v773
        %v1327 = vsub.f32 %v1124, %v777
        %v1328 = vsub.f32 %v1124, %v779
        %v1329 = vsub.f32 %v1129, %v783
        %v1330 = vsub.f32 %v1129, %v785
        %v1331 = vsub.f32 %v1134, %v789
        %v1332 = vsub.f32 %v1134, %v791
        %v1333 = vsub.f32 %v1139, %v795
        %v1334 = vsub.f32 %v1139, %v797
        %v1335 = vsub.f32 %v1144, %v801
        %v1336 = vsub.f32 %v1144, %v803
        %v1337 = vsub.f32 %v1149, %v807
        %v1338 = vsub.f32 %v1149, %v809
        %v1339 = vsub.f32 %v1154, %v813
        %v1340 = vsub.f32 %v1154, %v815
        %v1341 = vsub.f32 %v1159, %v819
        %v1342 = vsub.f32 %v1159, %v821
        %v1343 = vsub.f32 %v1164, %v825
        %v1344 = vsub.f32 %v1164, %v827
        %v1345 = vsub.f32 %v1169, %v831
        %v1346 = vsub.f32 %v1169, %v833
        %v1347 = vsub.f32 %v1174, %v837
        %v1348 = vsub.f32 %v1174, %v839
        %v1349 = vsub.f32 %v1179, %v843
        %v1350 = vsub.f32 %v1179, %v845
        %v1351 = vsub.f32 %v1184, %v849
        %v1352 = vsub.f32 %v1184, %v851
        %v1353 = vsub.f32 %v1189, %v855
        %v1354 = vsub.f32 %v1189, %v857
        %v1355 = vsub.f32 %v1194, %v861
        %v1356 = vsub.f32 %v1194, %v863
        %v1357 = vsub.f32 %v1199, %v867
        %v1358 = vsub.f32 %v1199, %v869
        %v1359 = vsub.f32 %v1204, %v873
        %v1360 = vsub.f32 %v1204, %v875
        %v1361 = vsub.f32 %v1209, %v879
        %v1362 = vsub.f32 %v1209, %v881
        %v1363 = vsub.f32 %v1214, %v885
        %v1364 = vsub.f32 %v1214, %v887
        %v1365 = vsub.f32 %v1219, %v891
        %v1366 = vsub.f32 %v1219, %v893
        %v1367 = vsub.f32 %v1224, %v897
        %v1368 = vsub.f32 %v1224, %v899
        %v1369 = vsub.f32 %v1229, %v903
        %v1370 = vsub.f32 %v1229, %v905
        %v1371 = vsub.f32 %v1234, %v909
        %v1372 = vsub.f32 %v1234, %v911
        %v1373 = vsub.f32 %v1239, %v915
        %v1374 = vsub.f32 %v1239, %v917
        %v1375 = vsub.f32 %v1244, %v921
        %v1376 = vsub.f32 %v1244, %v923
        %v1377 = vsub.f32 %v1249, %v927
        %v1378 = vsub.f32 %v1249, %v929
        %v1379 = vmin.f32 %v1251, %v1255
        %v1380 = vmin.f32 %v1253, %v1257
        %v1381 = vmin.f32 %v1379, %v1259
        %v1382 = vmin.f32 %v1380, %v1261
        %v1383 = vmin.f32 %v1381, %v1263
        %v1384 = vmin.f32 %v1382, %v1265
        %v1385 = vmin.f32 %v1383, %v1267
        %v1386 = vmin.f32 %v1384, %v1269
        %v1387 = vmin.f32 %v1385, %v1271
        %v1388 = vmin.f32 %v1386, %v1273
        %v1389 = vmin.f32 %v1387, %v1275
        %v1390 = vmin.f32 %v1388, %v1277
        %v1391 = vmin.f32 %v1389, %v1279
        %v1392 = vmin.f32 %v1390, %v1281
        %v1393 = vmin.f32 %v1391, %v1283
        %v1394 = vmin.f32 %v1392, %v1285
        %v1395 = vmin.f32 %v1393, %v1287
        %v1396 = vmin.f32 %v1394, %v1289
        %v1397 = vmin.f32 %v1395, %v1291
        %v1398 = vmin.f32 %v1396, %v1293
        %v1399 = vmin.f32 %v1397, %v1295
        %v1400 = vmin.f32 %v1398, %v1297
        %v1401 = vmin.f32 %v1399, %v1299
        %v1402 = vmin.f32 %v1400, %v1301
        %v1403 = vmin.f32 %v1401, %v1303
        %v1404 = vmin.f32 %v1402, %v1305
        %v1405 = vmin.f32 %v1403, %v1307
        %v1406 = vmin.f32 %v1404, %v1309
        %v1407 = vmin.f32 %v1405, %v1311
        %v1408 = vmin.f32 %v1406, %v1313
        %v1409 = vmin.f32 %v1407, %v1315
        %v1410 = vmin.f32 %v1408, %v1317
        %v1411 = vmin.f32 %v1409, %v1319
        %v1412 = vmin.f32 %v1410, %v1321
        %v1413 = vmin.f32 %v1411, %v1323
        %v1414 = vmin.f32 %v1412, %v1325
        %v1415 = vmin.f32 %v1413, %v1327
        %v1416 = vmin.f32 %v1414, %v1329
        %v1417 = vmin.f32 %v1415, %v1331
        %v1418 = vmin.f32 %v1416, %v1333
        %v1419 = vmin.f32 %v1417, %v1335
        %v1420 = vmin.f32 %v1418, %v1337
        %v1421 = vmin.f32 %v1419, %v1339
        %v1422 = vmin.f32 %v1420, %v1341
        %v1423 = vmin.f32 %v1421, %v1343
        %v1424 = vmin.f32 %v1422, %v1345
        %v1425 = vmin.f32 %v1423, %v1347
        %v1426 = vmin.f32 %v1424, %v1349
        %v1427 = vmin.f32 %v1425, %v1351
        %v1428 = vmin.f32 %v1426, %v1353
        %v1429 = vmin.f32 %v1427, %v1355
        %v1430 = vmin.f32 %v1428, %v1357
        %v1431 = vmin.f32 %v1429, %v1359
        %v1432 = vmin.f32 %v1430, %v1361
        %v1433 = vmin.f32 %v1431, %v1363
        %v1434 = vmin.f32 %v1432, %v1365
        %v1435 = vmin.f32 %v1433, %v1367
        %v1436 = vmin.f32 %v1434, %v1369
        %v1437 = vmin.f32 %v1435, %v1371
        %v1438 = vmin.f32 %v1436, %v1373
        %v1439 = vmin.f32 %v1437, %v1375
        %v1440 = vmin.f32 %v1438, %v1377
        %v1441 = vmin.f32 %v1439, %v1440
        %v1442 = vrot.slane %v1441, 4
        %v1443 = vmin.f32 %v1441, %v1442
        %v1444 = vrot.slane %v1443, 2
        %v1445 = vmin.f32 %v1443, %v1444
        %v1446 = vrot.slane %v1445, 1
        %v1447 = vmin.f32 %v1445, %v1446
        %v1448 = vmin.f32 %v1252, %v1256
        %v1449 = vmin.f32 %v1254, %v1258
        %v1450 = vmin.f32 %v1448, %v1260
        %v1451 = vmin.f32 %v1449, %v1262
        %v1452 = vmin.f32 %v1450, %v1264
        %v1453 = vmin.f32 %v1451, %v1266
        %v1454 = vmin.f32 %v1452, %v1268
        %v1455 = vmin.f32 %v1453, %v1270
        %v1456 = vmin.f32 %v1454, %v1272
        %v1457 = vmin.f32 %v1455, %v1274
        %v1458 = vmin.f32 %v1456, %v1276
        %v1459 = vmin.f32 %v1457, %v1278
        %v1460 = vmin.f32 %v1458, %v1280
        %v1461 = vmin.f32 %v1459, %v1282
        %v1462 = vmin.f32 %v1460, %v1284
        %v1463 = vmin.f32 %v1461, %v1286
        %v1464 = vmin.f32 %v1462, %v1288
        %v1465 = vmin.f32 %v1463, %v1290
        %v1466 = vmin.f32 %v1464, %v1292
        %v1467 = vmin.f32 %v1465, %v1294
        %v1468 = vmin.f32 %v1466, %v1296
        %v1469 = vmin.f32 %v1467, %v1298
        %v1470 = vmin.f32 %v1468, %v1300
        %v1471 = vmin.f32 %v1469, %v1302
        %v1472 = vmin.f32 %v1470, %v1304
        %v1473 = vmin.f32 %v1471, %v1306
        %v1474 = vmin.f32 %v1472, %v1308
        %v1475 = vmin.f32 %v1473, %v1310
        %v1476 = vmin.f32 %v1474, %v1312
        %v1477 = vmin.f32 %v1475, %v1314
        %v1478 = vmin.f32 %v1476, %v1316
        %v1479 = vmin.f32 %v1477, %v1318
        %v1480 = vmin.f32 %v1478, %v1320
        %v1481 = vmin.f32 %v1479, %v1322
        %v1482 = vmin.f32 %v1480, %v1324
        %v1483 = vmin.f32 %v1481, %v1326
        %v1484 = vmin.f32 %v1482, %v1328
        %v1485 = vmin.f32 %v1483, %v1330
        %v1486 = vmin.f32 %v1484, %v1332
        %v1487 = vmin.f32 %v1485, %v1334
        %v1488 = vmin.f32 %v1486, %v1336
        %v1489 = vmin.f32 %v1487, %v1338
        %v1490 = vmin.f32 %v1488, %v1340
        %v1491 = vmin.f32 %v1489, %v1342
        %v1492 = vmin.f32 %v1490, %v1344
        %v1493 = vmin.f32 %v1491, %v1346
        %v1494 = vmin.f32 %v1492, %v1348
        %v1495 = vmin.f32 %v1493, %v1350
        %v1496 = vmin.f32 %v1494, %v1352
        %v1497 = vmin.f32 %v1495, %v1354
        %v1498 = vmin.f32 %v1496, %v1356
        %v1499 = vmin.f32 %v1497, %v1358
        %v1500 = vmin.f32 %v1498, %v1360
        %v1501 = vmin.f32 %v1499, %v1362
        %v1502 = vmin.f32 %v1500, %v1364
        %v1503 = vmin.f32 %v1501, %v1366
        %v1504 = vmin.f32 %v1502, %v1368
        %v1505 = vmin.f32 %v1503, %v1370
        %v1506 = vmin.f32 %v1504, %v1372
        %v1507 = vmin.f32 %v1505, %v1374
        %v1508 = vmin.f32 %v1506, %v1376
        %v1509 = vmin.f32 %v1507, %v1378
        %v1510 = vmin.f32 %v1508, %v1509
        %v1511 = vrot.slane %v1510, 4
        %v1512 = vmin.f32 %v1510, %v1511
        %v1513 = vrot.slane %v1512, 2
        %v1514 = vmin.f32 %v1512, %v1513
        %v1515 = vrot.slane %v1514, 1
        %v1516 = vmin.f32 %v1514, %v1515
        %v1517 = vlaneseq
        %v1518 = vshrl.u32 %v1517, 7
        %v1519 = vadd.s32 %v1518, 8
        %v1520 = vadd.s32 %v1518, 16
        %v1521 = vadd.s32 %v1518, 24
        %v1522 = vadd.s32 %v1518, 32
        %v1523 = vadd.s32 %v1518, 40
        %v1524 = vadd.s32 %v1518, 48
        %v1525 = vadd.s32 %v1518, 56
        %v1526 = vadd.s32 %v1518, 64
        %v1527 = vadd.s32 %v1518, 72
        %v1528 = vadd.s32 %v1518, 80
        %v1529 = vadd.s32 %v1518, 88
        %v1530 = vadd.s32 %v1518, 96
        %v1531 = vadd.s32 %v1518, 104
        %v1532 = vadd.s32 %v1518, 112
        %v1533 = vadd.s32 %v1518, 120
        %v1534 = vadd.s32 %v1518, 128
        %v1535 = vadd.s32 %v1518, 136
        %v1536 = vadd.s32 %v1518, 144
        %v1537 = vadd.s32 %v1518, 152
        %v1538 = vadd.s32 %v1518, 160
        %v1539 = vadd.s32 %v1518, 168
        %v1540 = vadd.s32 %v1518, 176
        %v1541 = vadd.s32 %v1518, 184
        %v1542 = vadd.s32 %v1518, 192
        %v1543 = vadd.s32 %v1518, 200
        %v1544 = vadd.s32 %v1518, 208
        %v1545 = vadd.s32 %v1518, 216
        %v1546 = vadd.s32 %v1518, 224
        %v1547 = vadd.s32 %v1518, 232
        %v1548 = vadd.s32 %v1518, 240
        %v1549 = vadd.s32 %v1518, 248
        %v1550 = vadd.s32 %v1518, 256
        %v1551 = vadd.s32 %v1518, 264
        %v1552 = vadd.s32 %v1518, 272
        %v1553 = vadd.s32 %v1518, 280
        %v1554 = vadd.s32 %v1518, 288
        %v1555 = vadd.s32 %v1518, 296
        %v1556 = vadd.s32 %v1518, 304
        %v1557 = vadd.s32 %v1518, 312
        %v1558 = vadd.s32 %v1518, 320
        %v1559 = vadd.s32 %v1518, 328
        %v1560 = vadd.s32 %v1518, 336
        %v1561 = vadd.s32 %v1518, 344
        %v1562 = vadd.s32 %v1518, 352
        %v1563 = vadd.s32 %v1518, 360
        %v1564 = vadd.s32 %v1518, 368
        %v1565 = vadd.s32 %v1518, 376
        %v1566 = vadd.s32 %v1518, 384
        %v1567 = vadd.s32 %v1518, 392
        %v1568 = vadd.s32 %v1518, 400
        %v1569 = vadd.s32 %v1518, 408
        %v1570 = vadd.s32 %v1518, 416
        %v1571 = vadd.s32 %v1518, 424
        %v1572 = vadd.s32 %v1518, 432
        %v1573 = vadd.s32 %v1518, 440
        %v1574 = vadd.s32 %v1518, 448
        %v1575 = vadd.s32 %v1518, 456
        %v1576 = vadd.s32 %v1518, 464
        %v1577 = vadd.s32 %v1518, 472
        %v1578 = vadd.s32 %v1518, 480
        %v1579 = vadd.s32 %v1518, 488
        %v1580 = vadd.s32 %v1518, 496
        %v1581 = vadd.s32 %v1518, 504
        %vm1582 = vcmp.le.f32.partialorder %v1251, %v1447
        %vm1583 = vcmp.le.f32.partialorder %v1252, %v1516
        %vm1584 = vcmp.le.f32.partialorder %v1253, %v1447
        %vm1585 = vcmp.le.f32.partialorder %v1254, %v1516
        %vm1586 = vcmp.le.f32.partialorder %v1255, %v1447
        %vm1587 = vcmp.le.f32.partialorder %v1256, %v1516
        %vm1588 = vcmp.le.f32.partialorder %v1257, %v1447
        %vm1589 = vcmp.le.f32.partialorder %v1258, %v1516
        %vm1590 = vcmp.le.f32.partialorder %v1259, %v1447
        %vm1591 = vcmp.le.f32.partialorder %v1260, %v1516
        %vm1592 = vcmp.le.f32.partialorder %v1261, %v1447
        %vm1593 = vcmp.le.f32.partialorder %v1262, %v1516
        %vm1594 = vcmp.le.f32.partialorder %v1263, %v1447
        %vm1595 = vcmp.le.f32.partialorder %v1264, %v1516
        %vm1596 = vcmp.le.f32.partialorder %v1265, %v1447
        %vm1597 = vcmp.le.f32.partialorder %v1266, %v1516
        %vm1598 = vcmp.le.f32.partialorder %v1267, %v1447
        %vm1599 = vcmp.le.f32.partialorder %v1268, %v1516
        %vm1600 = vcmp.le.f32.partialorder %v1269, %v1447
        %vm1601 = vcmp.le.f32.partialorder %v1270, %v1516
        %vm1602 = vcmp.le.f32.partialorder %v1271, %v1447
        %vm1603 = vcmp.le.f32.partialorder %v1272, %v1516
        %vm1604 = vcmp.le.f32.partialorder %v1273, %v1447
        %vm1605 = vcmp.le.f32.partialorder %v1274, %v1516
        %vm1606 = vcmp.le.f32.partialorder %v1275, %v1447
        %vm1607 = vcmp.le.f32.partialorder %v1276, %v1516
        %vm1608 = vcmp.le.f32.partialorder %v1277, %v1447
        %vm1609 = vcmp.le.f32.partialorder %v1278, %v1516
        %vm1610 = vcmp.le.f32.partialorder %v1279, %v1447
        %vm1611 = vcmp.le.f32.partialorder %v1280, %v1516
        %vm1612 = vcmp.le.f32.partialorder %v1281, %v1447
        %vm1613 = vcmp.le.f32.partialorder %v1282, %v1516
        %vm1614 = vcmp.le.f32.partialorder %v1283, %v1447
        %vm1615 = vcmp.le.f32.partialorder %v1284, %v1516
        %vm1616 = vcmp.le.f32.partialorder %v1285, %v1447
        %vm1617 = vcmp.le.f32.partialorder %v1286, %v1516
        %vm1618 = vcmp.le.f32.partialorder %v1287, %v1447
        %vm1619 = vcmp.le.f32.partialorder %v1288, %v1516
        %vm1620 = vcmp.le.f32.partialorder %v1289, %v1447
        %vm1621 = vcmp.le.f32.partialorder %v1290, %v1516
        %vm1622 = vcmp.le.f32.partialorder %v1291, %v1447
        %vm1623 = vcmp.le.f32.partialorder %v1292, %v1516
        %vm1624 = vcmp.le.f32.partialorder %v1293, %v1447
        %vm1625 = vcmp.le.f32.partialorder %v1294, %v1516
        %vm1626 = vcmp.le.f32.partialorder %v1295, %v1447
        %vm1627 = vcmp.le.f32.partialorder %v1296, %v1516
        %vm1628 = vcmp.le.f32.partialorder %v1297, %v1447
        %vm1629 = vcmp.le.f32.partialorder %v1298, %v1516
        %vm1630 = vcmp.le.f32.partialorder %v1299, %v1447
        %vm1631 = vcmp.le.f32.partialorder %v1300, %v1516
        %vm1632 = vcmp.le.f32.partialorder %v1301, %v1447
        %vm1633 = vcmp.le.f32.partialorder %v1302, %v1516
        %vm1634 = vcmp.le.f32.partialorder %v1303, %v1447
        %vm1635 = vcmp.le.f32.partialorder %v1304, %v1516
        %vm1636 = vcmp.le.f32.partialorder %v1305, %v1447
        %vm1637 = vcmp.le.f32.partialorder %v1306, %v1516
        %vm1638 = vcmp.le.f32.partialorder %v1307, %v1447
        %vm1639 = vcmp.le.f32.partialorder %v1308, %v1516
        %vm1640 = vcmp.le.f32.partialorder %v1309, %v1447
        %vm1641 = vcmp.le.f32.partialorder %v1310, %v1516
        %vm1642 = vcmp.le.f32.partialorder %v1311, %v1447
        %vm1643 = vcmp.le.f32.partialorder %v1312, %v1516
        %vm1644 = vcmp.le.f32.partialorder %v1313, %v1447
        %vm1645 = vcmp.le.f32.partialorder %v1314, %v1516
        %vm1646 = vcmp.le.f32.partialorder %v1315, %v1447
        %vm1647 = vcmp.le.f32.partialorder %v1316, %v1516
        %vm1648 = vcmp.le.f32.partialorder %v1317, %v1447
        %vm1649 = vcmp.le.f32.partialorder %v1318, %v1516
        %vm1650 = vcmp.le.f32.partialorder %v1319, %v1447
        %vm1651 = vcmp.le.f32.partialorder %v1320, %v1516
        %vm1652 = vcmp.le.f32.partialorder %v1321, %v1447
        %vm1653 = vcmp.le.f32.partialorder %v1322, %v1516
        %vm1654 = vcmp.le.f32.partialorder %v1323, %v1447
        %vm1655 = vcmp.le.f32.partialorder %v1324, %v1516
        %vm1656 = vcmp.le.f32.partialorder %v1325, %v1447
        %vm1657 = vcmp.le.f32.partialorder %v1326, %v1516
        %vm1658 = vcmp.le.f32.partialorder %v1327, %v1447
        %vm1659 = vcmp.le.f32.partialorder %v1328, %v1516
        %vm1660 = vcmp.le.f32.partialorder %v1329, %v1447
        %vm1661 = vcmp.le.f32.partialorder %v1330, %v1516
        %vm1662 = vcmp.le.f32.partialorder %v1331, %v1447
        %vm1663 = vcmp.le.f32.partialorder %v1332, %v1516
        %vm1664 = vcmp.le.f32.partialorder %v1333, %v1447
        %vm1665 = vcmp.le.f32.partialorder %v1334, %v1516
        %vm1666 = vcmp.le.f32.partialorder %v1335, %v1447
        %vm1667 = vcmp.le.f32.partialorder %v1336, %v1516
        %vm1668 = vcmp.le.f32.partialorder %v1337, %v1447
        %vm1669 = vcmp.le.f32.partialorder %v1338, %v1516
        %vm1670 = vcmp.le.f32.partialorder %v1339, %v1447
        %vm1671 = vcmp.le.f32.partialorder %v1340, %v1516
        %vm1672 = vcmp.le.f32.partialorder %v1341, %v1447
        %vm1673 = vcmp.le.f32.partialorder %v1342, %v1516
        %vm1674 = vcmp.le.f32.partialorder %v1343, %v1447
        %vm1675 = vcmp.le.f32.partialorder %v1344, %v1516
        %vm1676 = vcmp.le.f32.partialorder %v1345, %v1447
        %vm1677 = vcmp.le.f32.partialorder %v1346, %v1516
        %vm1678 = vcmp.le.f32.partialorder %v1347, %v1447
        %vm1679 = vcmp.le.f32.partialorder %v1348, %v1516
        %vm1680 = vcmp.le.f32.partialorder %v1349, %v1447
        %vm1681 = vcmp.le.f32.partialorder %v1350, %v1516
        %vm1682 = vcmp.le.f32.partialorder %v1351, %v1447
        %vm1683 = vcmp.le.f32.partialorder %v1352, %v1516
        %vm1684 = vcmp.le.f32.partialorder %v1353, %v1447
        %vm1685 = vcmp.le.f32.partialorder %v1354, %v1516
        %vm1686 = vcmp.le.f32.partialorder %v1355, %v1447
        %vm1687 = vcmp.le.f32.partialorder %v1356, %v1516
        %vm1688 = vcmp.le.f32.partialorder %v1357, %v1447
        %vm1689 = vcmp.le.f32.partialorder %v1358, %v1516
        %vm1690 = vcmp.le.f32.partialorder %v1359, %v1447
        %vm1691 = vcmp.le.f32.partialorder %v1360, %v1516
        %vm1692 = vcmp.le.f32.partialorder %v1361, %v1447
        %vm1693 = vcmp.le.f32.partialorder %v1362, %v1516
        %vm1694 = vcmp.le.f32.partialorder %v1363, %v1447
        %vm1695 = vcmp.le.f32.partialorder %v1364, %v1516
        %vm1696 = vcmp.le.f32.partialorder %v1365, %v1447
        %vm1697 = vcmp.le.f32.partialorder %v1366, %v1516
        %vm1698 = vcmp.le.f32.partialorder %v1367, %v1447
        %vm1699 = vcmp.le.f32.partialorder %v1368, %v1516
        %vm1700 = vcmp.le.f32.partialorder %v1369, %v1447
        %vm1701 = vcmp.le.f32.partialorder %v1370, %v1516
        %vm1702 = vcmp.le.f32.partialorder %v1371, %v1447
        %vm1703 = vcmp.le.f32.partialorder %v1372, %v1516
        %vm1704 = vcmp.le.f32.partialorder %v1373, %v1447
        %vm1705 = vcmp.le.f32.partialorder %v1374, %v1516
        %vm1706 = vcmp.le.f32.partialorder %v1375, %v1447
        %vm1707 = vcmp.le.f32.partialorder %v1376, %v1516
        %vm1708 = vcmp.le.f32.partialorder %v1377, %v1447
        %vm1709 = vcmp.le.f32.partialorder %v1378, %v1516
        %v1710 = vsel %vm1582, %v1518, 1073741824
        %v1711 = vsel %vm1583, %v1518, 1073741824
        %v1712 = vsel %vm1584, %v1519, 1073741824
        %v1713 = vsel %vm1585, %v1519, 1073741824
        %v1714 = vsel %vm1586, %v1520, 1073741824
        %v1715 = vsel %vm1587, %v1520, 1073741824
        %v1716 = vsel %vm1588, %v1521, 1073741824
        %v1717 = vsel %vm1589, %v1521, 1073741824
        %v1718 = vsel %vm1590, %v1522, 1073741824
        %v1719 = vsel %vm1591, %v1522, 1073741824
        %v1720 = vsel %vm1592, %v1523, 1073741824
        %v1721 = vsel %vm1593, %v1523, 1073741824
        %v1722 = vsel %vm1594, %v1524, 1073741824
        %v1723 = vsel %vm1595, %v1524, 1073741824
        %v1724 = vsel %vm1596, %v1525, 1073741824
        %v1725 = vsel %vm1597, %v1525, 1073741824
        %v1726 = vsel %vm1598, %v1526, 1073741824
        %v1727 = vsel %vm1599, %v1526, 1073741824
        %v1728 = vsel %vm1600, %v1527, 1073741824
        %v1729 = vsel %vm1601, %v1527, 1073741824
        %v1730 = vsel %vm1602, %v1528, 1073741824
        %v1731 = vsel %vm1603, %v1528, 1073741824
        %v1732 = vsel %vm1604, %v1529, 1073741824
        %v1733 = vsel %vm1605, %v1529, 1073741824
        %v1734 = vsel %vm1606, %v1530, 1073741824
        %v1735 = vsel %vm1607, %v1530, 1073741824
        %v1736 = vsel %vm1608, %v1531, 1073741824
        %v1737 = vsel %vm1609, %v1531, 1073741824
        %v1738 = vsel %vm1610, %v1532, 1073741824
        %v1739 = vsel %vm1611, %v1532, 1073741824
        %v1740 = vsel %vm1612, %v1533, 1073741824
        %v1741 = vsel %vm1613, %v1533, 1073741824
        %v1742 = vsel %vm1614, %v1534, 1073741824
        %v1743 = vsel %vm1615, %v1534, 1073741824
        %v1744 = vsel %vm1616, %v1535, 1073741824
        %v1745 = vsel %vm1617, %v1535, 1073741824
        %v1746 = vsel %vm1618, %v1536, 1073741824
        %v1747 = vsel %vm1619, %v1536, 1073741824
        %v1748 = vsel %vm1620, %v1537, 1073741824
        %v1749 = vsel %vm1621, %v1537, 1073741824
        %v1750 = vsel %vm1622, %v1538, 1073741824
        %v1751 = vsel %vm1623, %v1538, 1073741824
        %v1752 = vsel %vm1624, %v1539, 1073741824
        %v1753 = vsel %vm1625, %v1539, 1073741824
        %v1754 = vsel %vm1626, %v1540, 1073741824
        %v1755 = vsel %vm1627, %v1540, 1073741824
        %v1756 = vsel %vm1628, %v1541, 1073741824
        %v1757 = vsel %vm1629, %v1541, 1073741824
        %v1758 = vsel %vm1630, %v1542, 1073741824
        %v1759 = vsel %vm1631, %v1542, 1073741824
        %v1760 = vsel %vm1632, %v1543, 1073741824
        %v1761 = vsel %vm1633, %v1543, 1073741824
        %v1762 = vsel %vm1634, %v1544, 1073741824
        %v1763 = vsel %vm1635, %v1544, 1073741824
        %v1764 = vsel %vm1636, %v1545, 1073741824
        %v1765 = vsel %vm1637, %v1545, 1073741824
        %v1766 = vsel %vm1638, %v1546, 1073741824
        %v1767 = vsel %vm1639, %v1546, 1073741824
        %v1768 = vsel %vm1640, %v1547, 1073741824
        %v1769 = vsel %vm1641, %v1547, 1073741824
        %v1770 = vsel %vm1642, %v1548, 1073741824
        %v1771 = vsel %vm1643, %v1548, 1073741824
        %v1772 = vsel %vm1644, %v1549, 1073741824
        %v1773 = vsel %vm1645, %v1549, 1073741824
        %v1774 = vsel %vm1646, %v1550, 1073741824
        %v1775 = vsel %vm1647, %v1550, 1073741824
        %v1776 = vsel %vm1648, %v1551, 1073741824
        %v1777 = vsel %vm1649, %v1551, 1073741824
        %v1778 = vsel %vm1650, %v1552, 1073741824
        %v1779 = vsel %vm1651, %v1552, 1073741824
        %v1780 = vsel %vm1652, %v1553, 1073741824
        %v1781 = vsel %vm1653, %v1553, 1073741824
        %v1782 = vsel %vm1654, %v1554, 1073741824
        %v1783 = vsel %vm1655, %v1554, 1073741824
        %v1784 = vsel %vm1656, %v1555, 1073741824
        %v1785 = vsel %vm1657, %v1555, 1073741824
        %v1786 = vsel %vm1658, %v1556, 1073741824
        %v1787 = vsel %vm1659, %v1556, 1073741824
        %v1788 = vsel %vm1660, %v1557, 1073741824
        %v1789 = vsel %vm1661, %v1557, 1073741824
        %v1790 = vsel %vm1662, %v1558, 1073741824
        %v1791 = vsel %vm1663, %v1558, 1073741824
        %v1792 = vsel %vm1664, %v1559, 1073741824
        %v1793 = vsel %vm1665, %v1559, 1073741824
        %v1794 = vsel %vm1666, %v1560, 1073741824
        %v1795 = vsel %vm1667, %v1560, 1073741824
        %v1796 = vsel %vm1668, %v1561, 1073741824
        %v1797 = vsel %vm1669, %v1561, 1073741824
        %v1798 = vsel %vm1670, %v1562, 1073741824
        %v1799 = vsel %vm1671, %v1562, 1073741824
        %v1800 = vsel %vm1672, %v1563, 1073741824
        %v1801 = vsel %vm1673, %v1563, 1073741824
        %v1802 = vsel %vm1674, %v1564, 1073741824
        %v1803 = vsel %vm1675, %v1564, 1073741824
        %v1804 = vsel %vm1676, %v1565, 1073741824
        %v1805 = vsel %vm1677, %v1565, 1073741824
        %v1806 = vsel %vm1678, %v1566, 1073741824
        %v1807 = vsel %vm1679, %v1566, 1073741824
        %v1808 = vsel %vm1680, %v1567, 1073741824
        %v1809 = vsel %vm1681, %v1567, 1073741824
        %v1810 = vsel %vm1682, %v1568, 1073741824
        %v1811 = vsel %vm1683, %v1568, 1073741824
        %v1812 = vsel %vm1684, %v1569, 1073741824
        %v1813 = vsel %vm1685, %v1569, 1073741824
        %v1814 = vsel %vm1686, %v1570, 1073741824
        %v1815 = vsel %vm1687, %v1570, 1073741824
        %v1816 = vsel %vm1688, %v1571, 1073741824
        %v1817 = vsel %vm1689, %v1571, 1073741824
        %v1818 = vsel %vm1690, %v1572, 1073741824
        %v1819 = vsel %vm1691, %v1572, 1073741824
        %v1820 = vsel %vm1692, %v1573, 1073741824
        %v1821 = vsel %vm1693, %v1573, 1073741824
        %v1822 = vsel %vm1694, %v1574, 1073741824
        %v1823 = vsel %vm1695, %v1574, 1073741824
        %v1824 = vsel %vm1696, %v1575, 1073741824
        %v1825 = vsel %vm1697, %v1575, 1073741824
        %v1826 = vsel %vm1698, %v1576, 1073741824
        %v1827 = vsel %vm1699, %v1576, 1073741824
        %v1828 = vsel %vm1700, %v1577, 1073741824
        %v1829 = vsel %vm1701, %v1577, 1073741824
        %v1830 = vsel %vm1702, %v1578, 1073741824
        %v1831 = vsel %vm1703, %v1578, 1073741824
        %v1832 = vsel %vm1704, %v1579, 1073741824
        %v1833 = vsel %vm1705, %v1579, 1073741824
        %v1834 = vsel %vm1706, %v1580, 1073741824
        %v1835 = vsel %vm1707, %v1580, 1073741824
        %v1836 = vsel %vm1708, %v1581, 1073741824
        %v1837 = vsel %vm1709, %v1581, 1073741824
        %vm1838 = vcmp.lt.s32.totalorder %v1710, %v1714
        %v1839 = vsel %vm1838, %v1710, %v1714
        %vm1840 = vcmp.lt.s32.totalorder %v1712, %v1716
        %v1841 = vsel %vm1840, %v1712, %v1716
        %vm1842 = vcmp.lt.s32.totalorder %v1839, %v1718
        %v1843 = vsel %vm1842, %v1839, %v1718
        %vm1844 = vcmp.lt.s32.totalorder %v1841, %v1720
        %v1845 = vsel %vm1844, %v1841, %v1720
        %vm1846 = vcmp.lt.s32.totalorder %v1843, %v1722
        %v1847 = vsel %vm1846, %v1843, %v1722
        %vm1848 = vcmp.lt.s32.totalorder %v1845, %v1724
        %v1849 = vsel %vm1848, %v1845, %v1724
        %vm1850 = vcmp.lt.s32.totalorder %v1847, %v1726
        %v1851 = vsel %vm1850, %v1847, %v1726
        %vm1852 = vcmp.lt.s32.totalorder %v1849, %v1728
        %v1853 = vsel %vm1852, %v1849, %v1728
        %vm1854 = vcmp.lt.s32.totalorder %v1851, %v1730
        %v1855 = vsel %vm1854, %v1851, %v1730
        %vm1856 = vcmp.lt.s32.totalorder %v1853, %v1732
        %v1857 = vsel %vm1856, %v1853, %v1732
        %vm1858 = vcmp.lt.s32.totalorder %v1855, %v1734
        %v1859 = vsel %vm1858, %v1855, %v1734
        %vm1860 = vcmp.lt.s32.totalorder %v1857, %v1736
        %v1861 = vsel %vm1860, %v1857, %v1736
        %vm1862 = vcmp.lt.s32.totalorder %v1859, %v1738
        %v1863 = vsel %vm1862, %v1859, %v1738
        %vm1864 = vcmp.lt.s32.totalorder %v1861, %v1740
        %v1865 = vsel %vm1864, %v1861, %v1740
        %vm1866 = vcmp.lt.s32.totalorder %v1863, %v1742
        %v1867 = vsel %vm1866, %v1863, %v1742
        %vm1868 = vcmp.lt.s32.totalorder %v1865, %v1744
        %v1869 = vsel %vm1868, %v1865, %v1744
        %vm1870 = vcmp.lt.s32.totalorder %v1867, %v1746
        %v1871 = vsel %vm1870, %v1867, %v1746
        %vm1872 = vcmp.lt.s32.totalorder %v1869, %v1748
        %v1873 = vsel %vm1872, %v1869, %v1748
        %vm1874 = vcmp.lt.s32.totalorder %v1871, %v1750
        %v1875 = vsel %vm1874, %v1871, %v1750
        %vm1876 = vcmp.lt.s32.totalorder %v1873, %v1752
        %v1877 = vsel %vm1876, %v1873, %v1752
        %vm1878 = vcmp.lt.s32.totalorder %v1875, %v1754
        %v1879 = vsel %vm1878, %v1875, %v1754
        %vm1880 = vcmp.lt.s32.totalorder %v1877, %v1756
        %v1881 = vsel %vm1880, %v1877, %v1756
        %vm1882 = vcmp.lt.s32.totalorder %v1879, %v1758
        %v1883 = vsel %vm1882, %v1879, %v1758
        %vm1884 = vcmp.lt.s32.totalorder %v1881, %v1760
        %v1885 = vsel %vm1884, %v1881, %v1760
        %vm1886 = vcmp.lt.s32.totalorder %v1883, %v1762
        %v1887 = vsel %vm1886, %v1883, %v1762
        %vm1888 = vcmp.lt.s32.totalorder %v1885, %v1764
        %v1889 = vsel %vm1888, %v1885, %v1764
        %vm1890 = vcmp.lt.s32.totalorder %v1887, %v1766
        %v1891 = vsel %vm1890, %v1887, %v1766
        %vm1892 = vcmp.lt.s32.totalorder %v1889, %v1768
        %v1893 = vsel %vm1892, %v1889, %v1768
        %vm1894 = vcmp.lt.s32.totalorder %v1891, %v1770
        %v1895 = vsel %vm1894, %v1891, %v1770
        %vm1896 = vcmp.lt.s32.totalorder %v1893, %v1772
        %v1897 = vsel %vm1896, %v1893, %v1772
        %vm1898 = vcmp.lt.s32.totalorder %v1895, %v1774
        %v1899 = vsel %vm1898, %v1895, %v1774
        %vm1900 = vcmp.lt.s32.totalorder %v1897, %v1776
        %v1901 = vsel %vm1900, %v1897, %v1776
        %vm1902 = vcmp.lt.s32.totalorder %v1899, %v1778
        %v1903 = vsel %vm1902, %v1899, %v1778
        %vm1904 = vcmp.lt.s32.totalorder %v1901, %v1780
        %v1905 = vsel %vm1904, %v1901, %v1780
        %vm1906 = vcmp.lt.s32.totalorder %v1903, %v1782
        %v1907 = vsel %vm1906, %v1903, %v1782
        %vm1908 = vcmp.lt.s32.totalorder %v1905, %v1784
        %v1909 = vsel %vm1908, %v1905, %v1784
        %vm1910 = vcmp.lt.s32.totalorder %v1907, %v1786
        %v1911 = vsel %vm1910, %v1907, %v1786
        %vm1912 = vcmp.lt.s32.totalorder %v1909, %v1788
        %v1913 = vsel %vm1912, %v1909, %v1788
        %vm1914 = vcmp.lt.s32.totalorder %v1911, %v1790
        %v1915 = vsel %vm1914, %v1911, %v1790
        %vm1916 = vcmp.lt.s32.totalorder %v1913, %v1792
        %v1917 = vsel %vm1916, %v1913, %v1792
        %vm1918 = vcmp.lt.s32.totalorder %v1915, %v1794
        %v1919 = vsel %vm1918, %v1915, %v1794
        %vm1920 = vcmp.lt.s32.totalorder %v1917, %v1796
        %v1921 = vsel %vm1920, %v1917, %v1796
        %vm1922 = vcmp.lt.s32.totalorder %v1919, %v1798
        %v1923 = vsel %vm1922, %v1919, %v1798
        %vm1924 = vcmp.lt.s32.totalorder %v1921, %v1800
        %v1925 = vsel %vm1924, %v1921, %v1800
        %vm1926 = vcmp.lt.s32.totalorder %v1923, %v1802
        %v1927 = vsel %vm1926, %v1923, %v1802
        %vm1928 = vcmp.lt.s32.totalorder %v1925, %v1804
        %v1929 = vsel %vm1928, %v1925, %v1804
        %vm1930 = vcmp.lt.s32.totalorder %v1927, %v1806
        %v1931 = vsel %vm1930, %v1927, %v1806
        %vm1932 = vcmp.lt.s32.totalorder %v1929, %v1808
        %v1933 = vsel %vm1932, %v1929, %v1808
        %vm1934 = vcmp.lt.s32.totalorder %v1931, %v1810
        %v1935 = vsel %vm1934, %v1931, %v1810
        %vm1936 = vcmp.lt.s32.totalorder %v1933, %v1812
        %v1937 = vsel %vm1936, %v1933, %v1812
        %vm1938 = vcmp.lt.s32.totalorder %v1935, %v1814
        %v1939 = vsel %vm1938, %v1935, %v1814
        %vm1940 = vcmp.lt.s32.totalorder %v1937, %v1816
        %v1941 = vsel %vm1940, %v1937, %v1816
        %vm1942 = vcmp.lt.s32.totalorder %v1939, %v1818
        %v1943 = vsel %vm1942, %v1939, %v1818
        %vm1944 = vcmp.lt.s32.totalorder %v1941, %v1820
        %v1945 = vsel %vm1944, %v1941, %v1820
        %vm1946 = vcmp.lt.s32.totalorder %v1943, %v1822
        %v1947 = vsel %vm1946, %v1943, %v1822
        %vm1948 = vcmp.lt.s32.totalorder %v1945, %v1824
        %v1949 = vsel %vm1948, %v1945, %v1824
        %vm1950 = vcmp.lt.s32.totalorder %v1947, %v1826
        %v1951 = vsel %vm1950, %v1947, %v1826
        %vm1952 = vcmp.lt.s32.totalorder %v1949, %v1828
        %v1953 = vsel %vm1952, %v1949, %v1828
        %vm1954 = vcmp.lt.s32.totalorder %v1951, %v1830
        %v1955 = vsel %vm1954, %v1951, %v1830
        %vm1956 = vcmp.lt.s32.totalorder %v1953, %v1832
        %v1957 = vsel %vm1956, %v1953, %v1832
        %vm1958 = vcmp.lt.s32.totalorder %v1955, %v1834
        %v1959 = vsel %vm1958, %v1955, %v1834
        %vm1960 = vcmp.lt.s32.totalorder %v1957, %v1836
        %v1961 = vsel %vm1960, %v1957, %v1836
        %vm1962 = vcmp.lt.s32.totalorder %v1959, %v1961
        %v1963 = vsel %vm1962, %v1959, %v1961
        %v1964 = vrot.slane %v1963, 4
        %vm1965 = vcmp.lt.s32.totalorder %v1963, %v1964
        %v1966 = vsel %vm1965, %v1963, %v1964
        %v1967 = vrot.slane %v1966, 2
        %vm1968 = vcmp.lt.s32.totalorder %v1966, %v1967
        %v1969 = vsel %vm1968, %v1966, %v1967
        %v1970 = vrot.slane %v1969, 1
        %vm1971 = vcmp.lt.s32.totalorder %v1969, %v1970
        %v1972 = vsel %vm1971, %v1969, %v1970
        %vm1973 = vcmp.lt.s32.totalorder %v1711, %v1715
        %v1974 = vsel %vm1973, %v1711, %v1715
        %vm1975 = vcmp.lt.s32.totalorder %v1713, %v1717
        %v1976 = vsel %vm1975, %v1713, %v1717
        %vm1977 = vcmp.lt.s32.totalorder %v1974, %v1719
        %v1978 = vsel %vm1977, %v1974, %v1719
        %vm1979 = vcmp.lt.s32.totalorder %v1976, %v1721
        %v1980 = vsel %vm1979, %v1976, %v1721
        %vm1981 = vcmp.lt.s32.totalorder %v1978, %v1723
        %v1982 = vsel %vm1981, %v1978, %v1723
        %vm1983 = vcmp.lt.s32.totalorder %v1980, %v1725
        %v1984 = vsel %vm1983, %v1980, %v1725
        %vm1985 = vcmp.lt.s32.totalorder %v1982, %v1727
        %v1986 = vsel %vm1985, %v1982, %v1727
        %vm1987 = vcmp.lt.s32.totalorder %v1984, %v1729
        %v1988 = vsel %vm1987, %v1984, %v1729
        %vm1989 = vcmp.lt.s32.totalorder %v1986, %v1731
        %v1990 = vsel %vm1989, %v1986, %v1731
        %vm1991 = vcmp.lt.s32.totalorder %v1988, %v1733
        %v1992 = vsel %vm1991, %v1988, %v1733
        %vm1993 = vcmp.lt.s32.totalorder %v1990, %v1735
        %v1994 = vsel %vm1993, %v1990, %v1735
        %vm1995 = vcmp.lt.s32.totalorder %v1992, %v1737
        %v1996 = vsel %vm1995, %v1992, %v1737
        %vm1997 = vcmp.lt.s32.totalorder %v1994, %v1739
        %v1998 = vsel %vm1997, %v1994, %v1739
        %vm1999 = vcmp.lt.s32.totalorder %v1996, %v1741
        %v2000 = vsel %vm1999, %v1996, %v1741
        %vm2001 = vcmp.lt.s32.totalorder %v1998, %v1743
        %v2002 = vsel %vm2001, %v1998, %v1743
        %vm2003 = vcmp.lt.s32.totalorder %v2000, %v1745
        %v2004 = vsel %vm2003, %v2000, %v1745
        %vm2005 = vcmp.lt.s32.totalorder %v2002, %v1747
        %v2006 = vsel %vm2005, %v2002, %v1747
        %vm2007 = vcmp.lt.s32.totalorder %v2004, %v1749
        %v2008 = vsel %vm2007, %v2004, %v1749
        %vm2009 = vcmp.lt.s32.totalorder %v2006, %v1751
        %v2010 = vsel %vm2009, %v2006, %v1751
        %vm2011 = vcmp.lt.s32.totalorder %v2008, %v1753
        %v2012 = vsel %vm2011, %v2008, %v1753
        %vm2013 = vcmp.lt.s32.totalorder %v2010, %v1755
        %v2014 = vsel %vm2013, %v2010, %v1755
        %vm2015 = vcmp.lt.s32.totalorder %v2012, %v1757
        %v2016 = vsel %vm2015, %v2012, %v1757
        %vm2017 = vcmp.lt.s32.totalorder %v2014, %v1759
        %v2018 = vsel %vm2017, %v2014, %v1759
        %vm2019 = vcmp.lt.s32.totalorder %v2016, %v1761
        %v2020 = vsel %vm2019, %v2016, %v1761
        %vm2021 = vcmp.lt.s32.totalorder %v2018, %v1763
        %v2022 = vsel %vm2021, %v2018, %v1763
        %vm2023 = vcmp.lt.s32.totalorder %v2020, %v1765
        %v2024 = vsel %vm2023, %v2020, %v1765
        %vm2025 = vcmp.lt.s32.totalorder %v2022, %v1767
        %v2026 = vsel %vm2025, %v2022, %v1767
        %vm2027 = vcmp.lt.s32.totalorder %v2024, %v1769
        %v2028 = vsel %vm2027, %v2024, %v1769
        %vm2029 = vcmp.lt.s32.totalorder %v2026, %v1771
        %v2030 = vsel %vm2029, %v2026, %v1771
        %vm2031 = vcmp.lt.s32.totalorder %v2028, %v1773
        %v2032 = vsel %vm2031, %v2028, %v1773
        %vm2033 = vcmp.lt.s32.totalorder %v2030, %v1775
        %v2034 = vsel %vm2033, %v2030, %v1775
        %vm2035 = vcmp.lt.s32.totalorder %v2032, %v1777
        %v2036 = vsel %vm2035, %v2032, %v1777
        %vm2037 = vcmp.lt.s32.totalorder %v2034, %v1779
        %v2038 = vsel %vm2037, %v2034, %v1779
        %vm2039 = vcmp.lt.s32.totalorder %v2036, %v1781
        %v2040 = vsel %vm2039, %v2036, %v1781
        %vm2041 = vcmp.lt.s32.totalorder %v2038, %v1783
        %v2042 = vsel %vm2041, %v2038, %v1783
        %vm2043 = vcmp.lt.s32.totalorder %v2040, %v1785
        %v2044 = vsel %vm2043, %v2040, %v1785
        %vm2045 = vcmp.lt.s32.totalorder %v2042, %v1787
        %v2046 = vsel %vm2045, %v2042, %v1787
        %vm2047 = vcmp.lt.s32.totalorder %v2044, %v1789
        %v2048 = vsel %vm2047, %v2044, %v1789
        %vm2049 = vcmp.lt.s32.totalorder %v2046, %v1791
        %v2050 = vsel %vm2049, %v2046, %v1791
        %vm2051 = vcmp.lt.s32.totalorder %v2048, %v1793
        %v2052 = vsel %vm2051, %v2048, %v1793
        %vm2053 = vcmp.lt.s32.totalorder %v2050, %v1795
        %v2054 = vsel %vm2053, %v2050, %v1795
        %vm2055 = vcmp.lt.s32.totalorder %v2052, %v1797
        %v2056 = vsel %vm2055, %v2052, %v1797
        %vm2057 = vcmp.lt.s32.totalorder %v2054, %v1799
        %v2058 = vsel %vm2057, %v2054, %v1799
        %vm2059 = vcmp.lt.s32.totalorder %v2056, %v1801
        %v2060 = vsel %vm2059, %v2056, %v1801
        %vm2061 = vcmp.lt.s32.totalorder %v2058, %v1803
        %v2062 = vsel %vm2061, %v2058, %v1803
        %vm2063 = vcmp.lt.s32.totalorder %v2060, %v1805
        %v2064 = vsel %vm2063, %v2060, %v1805
        %vm2065 = vcmp.lt.s32.totalorder %v2062, %v1807
        %v2066 = vsel %vm2065, %v2062, %v1807
        %vm2067 = vcmp.lt.s32.totalorder %v2064, %v1809
        %v2068 = vsel %vm2067, %v2064, %v1809
        %vm2069 = vcmp.lt.s32.totalorder %v2066, %v1811
        %v2070 = vsel %vm2069, %v2066, %v1811
        %vm2071 = vcmp.lt.s32.totalorder %v2068, %v1813
        %v2072 = vsel %vm2071, %v2068, %v1813
        %vm2073 = vcmp.lt.s32.totalorder %v2070, %v1815
        %v2074 = vsel %vm2073, %v2070, %v1815
        %vm2075 = vcmp.lt.s32.totalorder %v2072, %v1817
        %v2076 = vsel %vm2075, %v2072, %v1817
        %vm2077 = vcmp.lt.s32.totalorder %v2074, %v1819
        %v2078 = vsel %vm2077, %v2074, %v1819
        %vm2079 = vcmp.lt.s32.totalorder %v2076, %v1821
        %v2080 = vsel %vm2079, %v2076, %v1821
        %vm2081 = vcmp.lt.s32.totalorder %v2078, %v1823
        %v2082 = vsel %vm2081, %v2078, %v1823
        %vm2083 = vcmp.lt.s32.totalorder %v2080, %v1825
        %v2084 = vsel %vm2083, %v2080, %v1825
        %vm2085 = vcmp.lt.s32.totalorder %v2082, %v1827
        %v2086 = vsel %vm2085, %v2082, %v1827
        %vm2087 = vcmp.lt.s32.totalorder %v2084, %v1829
        %v2088 = vsel %vm2087, %v2084, %v1829
        %vm2089 = vcmp.lt.s32.totalorder %v2086, %v1831
        %v2090 = vsel %vm2089, %v2086, %v1831
        %vm2091 = vcmp.lt.s32.totalorder %v2088, %v1833
        %v2092 = vsel %vm2091, %v2088, %v1833
        %vm2093 = vcmp.lt.s32.totalorder %v2090, %v1835
        %v2094 = vsel %vm2093, %v2090, %v1835
        %vm2095 = vcmp.lt.s32.totalorder %v2092, %v1837
        %v2096 = vsel %vm2095, %v2092, %v1837
        %vm2097 = vcmp.lt.s32.totalorder %v2094, %v2096
        %v2098 = vsel %vm2097, %v2094, %v2096
        %v2099 = vrot.slane %v2098, 4
        %vm2100 = vcmp.lt.s32.totalorder %v2098, %v2099
        %v2101 = vsel %vm2100, %v2098, %v2099
        %v2102 = vrot.slane %v2101, 2
        %vm2103 = vcmp.lt.s32.totalorder %v2101, %v2102
        %v2104 = vsel %vm2103, %v2101, %v2102
        %v2105 = vrot.slane %v2104, 1
        %vm2106 = vcmp.lt.s32.totalorder %v2104, %v2105
        %v2107 = vsel %vm2106, %v2104, %v2105
        %v2108 = vcombine.low %v1972, %v2107
        %v2110 = vunpack.c.l.s4 1966171168
        %v2111 = vunpack.c.0.s8 %v2110
        %v2112 = vlaneseq
        %v2113 = vshrl.u32 %v2112, 7
        %v2114 = vsub.s32 %v2111, %v2113
        %v2115 = vrot.slane %v2108, %v2114
        %v2117 = vunpack.c.l.s4 1966171168
        %v2118 = vunpack.c.0.s8 %v2117
        %v2119 = vlaneseq
        %v2120 = vshrl.u32 %v2119, 7
        %v2121 = vsub.s32 %v2118, %v2120
        %v2122 = vrot.slane %v2115, %v2121
        %v2123 = vlaneseq
        %vm2124 = vcmp.ge.s32.totalorder %v2123, 0
        %vm2125 = vcmp.lt.s32.totalorder %v2123, 256
        %vm2126 = vmand %vm2124, %vm2125
        %2127 = vst.msk [vmem:[%s217] sm:$0x3] %vm2126, %v2122
        %s2128 = sand.u32 %s99, 1
        %s2129 = scalar_lea.sflag [#allocation4], %s2128
        %s2130 = sand.u32 %s99, 1
        %s2131 = smul.addr %s2130, 256
        %s2132 = scalar_lea.vmem [#allocation5], %s2131
        %s2133 = sand.u32 %s125, 1
        %s2134 = scalar_lea.sflag [#allocation7], %s2133
        %s2135 = sand.u32 %s125, 1
        %s2136 = smul.addr %s2135, 2
        %s2137 = scalar_lea.vmem [#allocation6], %s2136
        // Predicated region
        $region37: #{tpu_custom_call.1} parent=31 // pred_check
          %p2138 = pneg %p109
        $region38: #{tpu_custom_call.1} parent=31 // pred_check_branch
          %2140 = sbr.rel (%p2138) target = $region40
        $region39: #{tpu_custom_call.1} parent=31 // pred_region
          %s2141 = smul.u32 32, %s23
          %s2143 = ssub.s32 4096, 4096
          %2144 = vsyncadd %s2129, %s2143
          %s2145 = smul.addr %s2141, 128
          %s2146 = scalar_lea.hbm %s3, %s2145
          %s2147 = sshll.u32 %s2132, 4
          %s2148 = int_to_ptr.vmem [resolvable:$true] %s2147
          %2153 = dma.vmem_to_hbm [thread:$0]  %s2148, 4096, %s2146, %s2129, 128, 128, 8
        $region40: #{tpu_custom_call.1} parent=31 // pred_fallthru
          _
        // Predicated region
        $region41: #{tpu_custom_call.1} parent=31 // pred_check
          %p2154 = pneg %p135
        $region42: #{tpu_custom_call.1} parent=31 // pred_check_branch
          %2156 = sbr.rel (%p2154) target = $region44
        $region43: #{tpu_custom_call.1} parent=31 // pred_region
          %s2157 = smul.u32 2, %s23
          %s2159 = ssub.s32 32, 32
          %2160 = vsyncadd %s2134, %s2159
          %s2161 = smul.addr %s2157, 16
          %s2162 = scalar_lea.hbm %s4, %s2161
          %s2164 = sshll.u32 %s2137, 4
          %s2165 = int_to_ptr.vmem [resolvable:$true] %s2164
          %2167 = dma.vmem_to_hbm [thread:$0]  %s2165, 32, %s2162, %s2134
        $region44: #{tpu_custom_call.1} parent=31 // pred_fallthru
          _
      $region32: #{tpu_custom_call.1} parent=5 // pred_fallthru
        _
      %p2168 = scmp.le.s32.totalorder 2, %s18
      // Predicated region
      $region45: #{tpu_custom_call.1} parent=5 // pred_check
        %p2169 = pneg %p2168
      $region46: #{tpu_custom_call.1} parent=5 // pred_check_branch
        %2171 = sbr.rel (%p2169) target = $region48
      $region47: #{tpu_custom_call.1} parent=5 // pred_region
        %s2172 = ssub.s32 %s18, 2
        // Predicated region
        $region49: #{tpu_custom_call.1} parent=47 // pred_check
          %p2173 = pneg %p115
        $region50: #{tpu_custom_call.1} parent=47 // pred_check_branch
          %2175 = sbr.rel (%p2173) target = $region52
        $region51: #{tpu_custom_call.1} parent=47 // pred_region
          %s2176 = sand.u32 %s100, 1
          %s2177 = scalar_lea.sflag [#allocation4], %s2176
          %s2178 = sand.u32 %s100, 1
          %s2179 = smul.addr %s2178, 256
          %s2180 = scalar_lea.vmem [#allocation5], %s2179
          %2181 = dma.done %s2177, 4096
        $region52: #{tpu_custom_call.1} parent=47 // pred_fallthru
          _
        // Predicated region
        $region53: #{tpu_custom_call.1} parent=47 // pred_check
          %p2182 = pneg %p141
        $region54: #{tpu_custom_call.1} parent=47 // pred_check_branch
          %2184 = sbr.rel (%p2182) target = $region56
        $region55: #{tpu_custom_call.1} parent=47 // pred_region
          %s2185 = sand.u32 %s126, 1
          %s2186 = scalar_lea.sflag [#allocation7], %s2185
          %s2187 = sand.u32 %s126, 1
          %s2188 = smul.addr %s2187, 2
          %s2189 = scalar_lea.vmem [#allocation6], %s2188
          %2190 = dma.done %s2186, 32
        $region56: #{tpu_custom_call.1} parent=47 // pred_fallthru
          _
      $region48: #{tpu_custom_call.1} parent=5 // pred_fallthru
        _
    $region6: #{tpu_custom_call.1} parent=1 // loop_footer
      %s22 = sadd.s32 1, %s18
    $region7: #{tpu_custom_call.1} parent=1 // loop_footer_branch
      %17 = sbr.rel target = $region3
    $region8: #{tpu_custom_call.1} parent=1 // loop_exit
      _
    %2191 = vsyncpa [#allocation3], 1
    %s2192 = scalar_lea.sflag [#allocation3], 1
    %2193 = vsyncpa %s2192, 1
    %2194 = vsyncpa [#allocation4], 1
    %s2195 = scalar_lea.sflag [#allocation4], 1
    %2196 = vsyncpa %s2195, 1
    %2197 = vsyncpa [#allocation7], 1
    %s2198 = scalar_lea.sflag [#allocation7], 1
    %2199 = vsyncpa %s2198, 1

</llo_original>
